<compile_context>
chip_gen: v5e
topology: v5e:2x2
jax: 0.10.0
libtpu: 0.0.40
codegen_flags: <defaults>
</compile_context>

<pallas_src>
import functools

import jax
import jax.numpy as jnp
from jax.experimental import pallas as pl
from jax.experimental.pallas import tpu as pltpu

HIDDEN = 128


def neumf_kernel(uid_ref, iid_ref,           # scalar-prefetch ids (SMEM)
                 pu_hbm, qv_hbm,             # packed embedding tables (HBM / ANY)
                 w1u_ref, w1v_ref, b1_ref,   # VMEM-resident weights
                 w2_ref, b2_ref,
                 wpg_ref, wpm_ref, bp_ref,
                 out_ref,                    # (TB, 1) output tile
                 pu_buf, qv_buf, sem,        # scratch: gather buffers + DMA sems
                 *, tb, f):
    tile = pl.program_id(0)
    base = tile * tb

    # --- Fused embedding gather: per-row HBM -> VMEM DMAs for this tile. ----
    copies = []
    for r in range(tb):
        uid = uid_ref[base + r]
        iid = iid_ref[base + r]
        copies.append(pltpu.make_async_copy(
            pu_hbm.at[pl.ds(uid, 1)], pu_buf.at[pl.ds(r, 1)], sem.at[0]))
        copies.append(pltpu.make_async_copy(
            qv_hbm.at[pl.ds(iid, 1)], qv_buf.at[pl.ds(r, 1)], sem.at[1]))
    for c in copies:            # issue all gathers (in flight concurrently)
        c.start()
    for c in copies:            # then wait for all of them
        c.wait()

    pu = pu_buf[...]            # (TB, 2F): rows are [P_row | U_row]
    qv = qv_buf[...]            # (TB, 2F): rows are [Q_row | V_row]

    # GMF branch: elementwise product of the MF halves.            (TB, F)
    gmf = pu[:, :f] * qv[:, :f]

    # MLP branch: Linear(2F -> H) on concat([u, v]), concat-free.  (TB, H)
    u = pu[:, f:]
    v = qv[:, f:]
    h = (jnp.dot(u, w1u_ref[...], preferred_element_type=jnp.float32)
         + jnp.dot(v, w1v_ref[...], preferred_element_type=jnp.float32)
         + b1_ref[...])
    h = jnp.maximum(h, 0.0)                                        # ReLU

    m = jnp.dot(h, w2_ref[...], preferred_element_type=jnp.float32) + b2_ref[...]
    m = jnp.maximum(m, 0.0)                                        # ReLU  (TB, F)

    # Prediction Linear(2F -> 1): VPU multiply + lane reduction (keeps the
    # N=1 matmuls off the MXU), then Sigmoid.                      (TB, 1)
    logit = (jnp.sum(gmf * wpg_ref[...] + m * wpm_ref[...],
                     axis=-1, keepdims=True)
             + bp_ref[...])
    out_ref[...] = jax.nn.sigmoid(logit)


def neumf_forward(user_id, item_id, params, *, tb=8):
    pu_tbl = params["PU"]        # (num_users+1, 2F)  rows = [P | U]
    qv_tbl = params["QV"]        # (num_items+1, 2F)  rows = [Q | V]
    f2 = pu_tbl.shape[1]
    f = f2 // 2

    assert tb % 8 == 0, "batch tile must be a multiple of 8 sublanes (f32)"
    b = user_id.shape[0]
    nt = pl.cdiv(b, tb)
    b_pad = nt * tb

    # Pad ids to a whole number of tiles (index 0 is a valid table row; the
    # padded outputs are sliced away below).
    uid = jnp.zeros((b_pad,), jnp.int32).at[:b].set(user_id.astype(jnp.int32))
    iid = jnp.zeros((b_pad,), jnp.int32).at[:b].set(item_id.astype(jnp.int32))

    weights = [params["W1u"], params["W1v"], params["b1"],
               params["W2"], params["b2"],
               params["Wpg"], params["Wpm"], params["bp"]]

    def resident(a):  # tiny weight: whole array stays in VMEM across all tiles
        return pl.BlockSpec(a.shape, lambda i, *_: (0, 0))

    grid_spec = pltpu.PrefetchScalarGridSpec(
        num_scalar_prefetch=2,                       # user_id, item_id -> SMEM
        grid=(nt,),
        in_specs=[pl.BlockSpec(memory_space=pl.ANY),   # PU table stays in HBM
                  pl.BlockSpec(memory_space=pl.ANY),   # QV table stays in HBM
                  *[resident(a) for a in weights]],
        out_specs=pl.BlockSpec((tb, 1), lambda i, *_: (i, 0)),
        scratch_shapes=[pltpu.VMEM((tb, f2), pu_tbl.dtype),
                        pltpu.VMEM((tb, f2), qv_tbl.dtype),
                        pltpu.SemaphoreType.DMA((2,))],
    )

    out = pl.pallas_call(
        functools.partial(neumf_kernel, tb=tb, f=f),
        out_shape=jax.ShapeDtypeStruct((b_pad, 1), jnp.float32),
        grid_spec=grid_spec,
        compiler_params=pltpu.CompilerParams(
            dimension_semantics=("parallel",)),        # megacore split on v7x
    )(uid, iid, pu_tbl, qv_tbl, *weights)
    return out[:b]


def neumf_reference(user_id, item_id, params):
    """Pure-JAX reference mirroring the PyTorch forward (eval mode)."""
    pu = params["PU"][user_id]
    qv = params["QV"][item_id]
    f = pu.shape[-1] // 2
    gmf = pu[:, :f] * qv[:, :f]
    u, v = pu[:, f:], qv[:, f:]
    h = jnp.maximum(u @ params["W1u"] + v @ params["W1v"] + params["b1"], 0.0)
    m = jnp.maximum(h @ params["W2"] + params["b2"], 0.0)
    logit = gmf @ params["Wpg"].T + m @ params["Wpm"].T + params["bp"]
    return jax.nn.sigmoid(logit)


def init_params(key, num_factors, num_users, num_items):
    fdim = num_factors
    ks = jax.random.split(key, 9)
    s = 0.1
    p = jax.random.normal(ks[0], (num_users + 1, fdim), jnp.float32) * s  # GMF user
    q = jax.random.normal(ks[1], (num_items + 1, fdim), jnp.float32) * s  # GMF item
    u = jax.random.normal(ks[2], (num_users + 1, fdim), jnp.float32) * s  # MLP user
    v = jax.random.normal(ks[3], (num_items + 1, fdim), jnp.float32) * s  # MLP item
    return dict(
        # packed embedding tables: user rows = [P | U], item rows = [Q | V]
        PU=jnp.concatenate([p, u], axis=1),
        QV=jnp.concatenate([q, v], axis=1),
        # mlp Linear(2F -> HIDDEN) stored [in, out], split into u / v halves
        W1u=jax.random.normal(ks[4], (fdim, HIDDEN), jnp.float32) * s,
        W1v=jax.random.normal(ks[5], (fdim, HIDDEN), jnp.float32) * s,
        b1=jnp.zeros((1, HIDDEN), jnp.float32),
        # mlp Linear(HIDDEN -> F)
        W2=jax.random.normal(ks[6], (HIDDEN, fdim), jnp.float32) * s,
        b2=jnp.zeros((1, fdim), jnp.float32),
        # prediction Linear(2F -> 1), stored as (1, F) rows for the VPU path
        Wpg=jax.random.normal(ks[7], (1, fdim), jnp.float32) * s,
        Wpm=jax.random.normal(ks[8], (1, fdim), jnp.float32) * s,
        bp=jnp.zeros((1, 1), jnp.float32),
    )


if __name__ == "__main__":
    num_factors = 16
    num_users = 10
    num_items = 20
    batch = 16            # 2 batch tiles of 8 -> exercises the tiled grid

    key = jax.random.PRNGKey(0)
    k_params, k_user, k_item = jax.random.split(key, 3)
    params = init_params(k_params, num_factors, num_users, num_items)

    user_id = jax.random.randint(k_user, (batch,), 0, num_users + 1, dtype=jnp.int32)
    item_id = jax.random.randint(k_item, (batch,), 0, num_items + 1, dtype=jnp.int32)

    out = neumf_forward(user_id, item_id, params, tb=8)
    out = jax.block_until_ready(out)

    ref = neumf_reference(user_id, item_id, params)
    assert out.shape == (batch, 1)
    assert jnp.allclose(out, ref, atol=1e-5, rtol=1e-5)

    print("KERNEL_OK")
</pallas_src>

<mosaic_0001>
module attributes {stable_mosaic.version = 11 : i64} {
  func.func @neumf_kernel(%arg0: i32, %arg1: memref<16xi32, #tpu.memory_space<smem>>, %arg2: memref<16xi32, #tpu.memory_space<smem>>, %arg3: memref<11x32xf32, #tpu.memory_space<any>>, %arg4: memref<21x32xf32, #tpu.memory_space<any>>, %arg5: memref<16x128xf32, #tpu.memory_space<vmem>>, %arg6: memref<16x128xf32, #tpu.memory_space<vmem>>, %arg7: memref<1x128xf32, #tpu.memory_space<vmem>>, %arg8: memref<128x16xf32, #tpu.memory_space<vmem>>, %arg9: memref<1x16xf32, #tpu.memory_space<vmem>>, %arg10: memref<1x16xf32, #tpu.memory_space<vmem>>, %arg11: memref<1x16xf32, #tpu.memory_space<vmem>>, %arg12: memref<1x1xf32, #tpu.memory_space<vmem>>, %arg13: memref<8x1xf32, #tpu.memory_space<vmem>>, %arg14: memref<8x32xf32, #tpu.memory_space<vmem>>, %arg15: memref<8x32xf32, #tpu.memory_space<vmem>>, %arg16: memref<2x!tpu.dma_semaphore, #tpu.memory_space<semaphore_mem>>) attributes {dimension_semantics = [#tpu.dimension_semantics<parallel>], iteration_bounds = array<i64: 2>, scalar_prefetch = 2 : i64, scratch_operands = 3 : i64, tpu.core_type = #tpu.core_type<tc>, window_params = [{}, {}, {pipeline_mode = #tpu.pipeline_mode<synchronous>, transform_indices = @transform_2, window_bounds = array<i64: 16, 128>}, {pipeline_mode = #tpu.pipeline_mode<synchronous>, transform_indices = @transform_3, window_bounds = array<i64: 16, 128>}, {pipeline_mode = #tpu.pipeline_mode<synchronous>, transform_indices = @transform_4, window_bounds = array<i64: 1, 128>}, {pipeline_mode = #tpu.pipeline_mode<synchronous>, transform_indices = @transform_5, window_bounds = array<i64: 128, 16>}, {pipeline_mode = #tpu.pipeline_mode<synchronous>, transform_indices = @transform_6, window_bounds = array<i64: 1, 16>}, {pipeline_mode = #tpu.pipeline_mode<synchronous>, transform_indices = @transform_7, window_bounds = array<i64: 1, 16>}, {pipeline_mode = #tpu.pipeline_mode<synchronous>, transform_indices = @transform_8, window_bounds = array<i64: 1, 16>}, {pipeline_mode = #tpu.pipeline_mode<synchronous>, transform_indices = @transform_9, window_bounds = array<i64: 1, 1>}, {transform_indices = @transform_10, window_bounds = array<i64: 8, 1>}]} {
    %c8_i32 = arith.constant 8 : i32
    %0 = arith.muli %arg0, %c8_i32 : i32
    %c0_i32 = arith.constant 0 : i32
    %1 = arith.addi %0, %c0_i32 : i32
    %2 = arith.index_cast %1 : i32 to index
    %3 = memref.load %arg1[%2] : memref<16xi32, #tpu.memory_space<smem>>
    %c0_i32_0 = arith.constant 0 : i32
    %4 = arith.addi %0, %c0_i32_0 : i32
    %5 = arith.index_cast %4 : i32 to index
    %6 = memref.load %arg2[%5] : memref<16xi32, #tpu.memory_space<smem>>
    %c1_i32 = arith.constant 1 : i32
    %7 = arith.addi %0, %c1_i32 : i32
    %8 = arith.index_cast %7 : i32 to index
    %9 = memref.load %arg1[%8] : memref<16xi32, #tpu.memory_space<smem>>
    %c1_i32_1 = arith.constant 1 : i32
    %10 = arith.addi %0, %c1_i32_1 : i32
    %11 = arith.index_cast %10 : i32 to index
    %12 = memref.load %arg2[%11] : memref<16xi32, #tpu.memory_space<smem>>
    %c2_i32 = arith.constant 2 : i32
    %13 = arith.addi %0, %c2_i32 : i32
    %14 = arith.index_cast %13 : i32 to index
    %15 = memref.load %arg1[%14] : memref<16xi32, #tpu.memory_space<smem>>
    %c2_i32_2 = arith.constant 2 : i32
    %16 = arith.addi %0, %c2_i32_2 : i32
    %17 = arith.index_cast %16 : i32 to index
    %18 = memref.load %arg2[%17] : memref<16xi32, #tpu.memory_space<smem>>
    %c3_i32 = arith.constant 3 : i32
    %19 = arith.addi %0, %c3_i32 : i32
    %20 = arith.index_cast %19 : i32 to index
    %21 = memref.load %arg1[%20] : memref<16xi32, #tpu.memory_space<smem>>
    %c3_i32_3 = arith.constant 3 : i32
    %22 = arith.addi %0, %c3_i32_3 : i32
    %23 = arith.index_cast %22 : i32 to index
    %24 = memref.load %arg2[%23] : memref<16xi32, #tpu.memory_space<smem>>
    %c4_i32 = arith.constant 4 : i32
    %25 = arith.addi %0, %c4_i32 : i32
    %26 = arith.index_cast %25 : i32 to index
    %27 = memref.load %arg1[%26] : memref<16xi32, #tpu.memory_space<smem>>
    %c4_i32_4 = arith.constant 4 : i32
    %28 = arith.addi %0, %c4_i32_4 : i32
    %29 = arith.index_cast %28 : i32 to index
    %30 = memref.load %arg2[%29] : memref<16xi32, #tpu.memory_space<smem>>
    %c5_i32 = arith.constant 5 : i32
    %31 = arith.addi %0, %c5_i32 : i32
    %32 = arith.index_cast %31 : i32 to index
    %33 = memref.load %arg1[%32] : memref<16xi32, #tpu.memory_space<smem>>
    %c5_i32_5 = arith.constant 5 : i32
    %34 = arith.addi %0, %c5_i32_5 : i32
    %35 = arith.index_cast %34 : i32 to index
    %36 = memref.load %arg2[%35] : memref<16xi32, #tpu.memory_space<smem>>
    %c6_i32 = arith.constant 6 : i32
    %37 = arith.addi %0, %c6_i32 : i32
    %38 = arith.index_cast %37 : i32 to index
    %39 = memref.load %arg1[%38] : memref<16xi32, #tpu.memory_space<smem>>
    %c6_i32_6 = arith.constant 6 : i32
    %40 = arith.addi %0, %c6_i32_6 : i32
    %41 = arith.index_cast %40 : i32 to index
    %42 = memref.load %arg2[%41] : memref<16xi32, #tpu.memory_space<smem>>
    %c7_i32 = arith.constant 7 : i32
    %43 = arith.addi %0, %c7_i32 : i32
    %44 = arith.index_cast %43 : i32 to index
    %45 = memref.load %arg1[%44] : memref<16xi32, #tpu.memory_space<smem>>
    %c7_i32_7 = arith.constant 7 : i32
    %46 = arith.addi %0, %c7_i32_7 : i32
    %47 = arith.index_cast %46 : i32 to index
    %48 = memref.load %arg2[%47] : memref<16xi32, #tpu.memory_space<smem>>
    %c0_i32_8 = arith.constant 0 : i32
    %c0_i32_9 = arith.constant 0 : i32
    %49 = tpu.memref_slice %arg3[%3, %c0_i32_9] : memref<11x32xf32, #tpu.memory_space<any>> -> memref<1x32xf32, #tpu.memory_space<any>>
    %c0_i32_10 = arith.constant 0 : i32
    %c0_i32_11 = arith.constant 0 : i32
    %50 = tpu.memref_slice %arg14[%c0_i32_10, %c0_i32_11] : memref<8x32xf32, #tpu.memory_space<vmem>> -> memref<1x32xf32, #tpu.memory_space<vmem>>
    %51 = tpu.memref_slice %arg16[%c0_i32_8] : memref<2x!tpu.dma_semaphore, #tpu.memory_space<semaphore_mem>> -> memref<1x!tpu.dma_semaphore, #tpu.memory_space<semaphore_mem>>
    %52 = tpu.memref_squeeze %51 : memref<1x!tpu.dma_semaphore, #tpu.memory_space<semaphore_mem>> -> memref<!tpu.dma_semaphore, #tpu.memory_space<semaphore_mem>>
    tpu.enqueue_dma source(%49 : memref<1x32xf32, #tpu.memory_space<any>>) target(%50 : memref<1x32xf32, #tpu.memory_space<vmem>>) target_semaphore(%52 : memref<!tpu.dma_semaphore, #tpu.memory_space<semaphore_mem>>)
    %c1_i32_12 = arith.constant 1 : i32
    %c0_i32_13 = arith.constant 0 : i32
    %53 = tpu.memref_slice %arg4[%6, %c0_i32_13] : memref<21x32xf32, #tpu.memory_space<any>> -> memref<1x32xf32, #tpu.memory_space<any>>
    %c0_i32_14 = arith.constant 0 : i32
    %c0_i32_15 = arith.constant 0 : i32
    %54 = tpu.memref_slice %arg15[%c0_i32_14, %c0_i32_15] : memref<8x32xf32, #tpu.memory_space<vmem>> -> memref<1x32xf32, #tpu.memory_space<vmem>>
    %55 = tpu.memref_slice %arg16[%c1_i32_12] : memref<2x!tpu.dma_semaphore, #tpu.memory_space<semaphore_mem>> -> memref<1x!tpu.dma_semaphore, #tpu.memory_space<semaphore_mem>>
    %56 = tpu.memref_squeeze %55 : memref<1x!tpu.dma_semaphore, #tpu.memory_space<semaphore_mem>> -> memref<!tpu.dma_semaphore, #tpu.memory_space<semaphore_mem>>
    tpu.enqueue_dma source(%53 : memref<1x32xf32, #tpu.memory_space<any>>) target(%54 : memref<1x32xf32, #tpu.memory_space<vmem>>) target_semaphore(%56 : memref<!tpu.dma_semaphore, #tpu.memory_space<semaphore_mem>>)
    %c0_i32_16 = arith.constant 0 : i32
    %c0_i32_17 = arith.constant 0 : i32
    %57 = tpu.memref_slice %arg3[%9, %c0_i32_17] : memref<11x32xf32, #tpu.memory_space<any>> -> memref<1x32xf32, #tpu.memory_space<any>>
    %c1_i32_18 = arith.constant 1 : i32
    %c0_i32_19 = arith.constant 0 : i32
    %58 = tpu.memref_slice %arg14[%c1_i32_18, %c0_i32_19] : memref<8x32xf32, #tpu.memory_space<vmem>> -> memref<1x32xf32, #tpu.memory_space<vmem>>
    %59 = tpu.memref_slice %arg16[%c0_i32_16] : memref<2x!tpu.dma_semaphore, #tpu.memory_space<semaphore_mem>> -> memref<1x!tpu.dma_semaphore, #tpu.memory_space<semaphore_mem>>
    %60 = tpu.memref_squeeze %59 : memref<1x!tpu.dma_semaphore, #tpu.memory_space<semaphore_mem>> -> memref<!tpu.dma_semaphore, #tpu.memory_space<semaphore_mem>>
    tpu.enqueue_dma source(%57 : memref<1x32xf32, #tpu.memory_space<any>>) target(%58 : memref<1x32xf32, #tpu.memory_space<vmem>>) target_semaphore(%60 : memref<!tpu.dma_semaphore, #tpu.memory_space<semaphore_mem>>)
    %c1_i32_20 = arith.constant 1 : i32
    %c0_i32_21 = arith.constant 0 : i32
    %61 = tpu.memref_slice %arg4[%12, %c0_i32_21] : memref<21x32xf32, #tpu.memory_space<any>> -> memref<1x32xf32, #tpu.memory_space<any>>
    %c1_i32_22 = arith.constant 1 : i32
    %c0_i32_23 = arith.constant 0 : i32
    %62 = tpu.memref_slice %arg15[%c1_i32_22, %c0_i32_23] : memref<8x32xf32, #tpu.memory_space<vmem>> -> memref<1x32xf32, #tpu.memory_space<vmem>>
    %63 = tpu.memref_slice %arg16[%c1_i32_20] : memref<2x!tpu.dma_semaphore, #tpu.memory_space<semaphore_mem>> -> memref<1x!tpu.dma_semaphore, #tpu.memory_space<semaphore_mem>>
    %64 = tpu.memref_squeeze %63 : memref<1x!tpu.dma_semaphore, #tpu.memory_space<semaphore_mem>> -> memref<!tpu.dma_semaphore, #tpu.memory_space<semaphore_mem>>
    tpu.enqueue_dma source(%61 : memref<1x32xf32, #tpu.memory_space<any>>) target(%62 : memref<1x32xf32, #tpu.memory_space<vmem>>) target_semaphore(%64 : memref<!tpu.dma_semaphore, #tpu.memory_space<semaphore_mem>>)
    %c0_i32_24 = arith.constant 0 : i32
    %c0_i32_25 = arith.constant 0 : i32
    %65 = tpu.memref_slice %arg3[%15, %c0_i32_25] : memref<11x32xf32, #tpu.memory_space<any>> -> memref<1x32xf32, #tpu.memory_space<any>>
    %c2_i32_26 = arith.constant 2 : i32
    %c0_i32_27 = arith.constant 0 : i32
    %66 = tpu.memref_slice %arg14[%c2_i32_26, %c0_i32_27] : memref<8x32xf32, #tpu.memory_space<vmem>> -> memref<1x32xf32, #tpu.memory_space<vmem>>
    %67 = tpu.memref_slice %arg16[%c0_i32_24] : memref<2x!tpu.dma_semaphore, #tpu.memory_space<semaphore_mem>> -> memref<1x!tpu.dma_semaphore, #tpu.memory_space<semaphore_mem>>
    %68 = tpu.memref_squeeze %67 : memref<1x!tpu.dma_semaphore, #tpu.memory_space<semaphore_mem>> -> memref<!tpu.dma_semaphore, #tpu.memory_space<semaphore_mem>>
    tpu.enqueue_dma source(%65 : memref<1x32xf32, #tpu.memory_space<any>>) target(%66 : memref<1x32xf32, #tpu.memory_space<vmem>>) target_semaphore(%68 : memref<!tpu.dma_semaphore, #tpu.memory_space<semaphore_mem>>)
    %c1_i32_28 = arith.constant 1 : i32
    %c0_i32_29 = arith.constant 0 : i32
    %69 = tpu.memref_slice %arg4[%18, %c0_i32_29] : memref<21x32xf32, #tpu.memory_space<any>> -> memref<1x32xf32, #tpu.memory_space<any>>
    %c2_i32_30 = arith.constant 2 : i32
    %c0_i32_31 = arith.constant 0 : i32
    %70 = tpu.memref_slice %arg15[%c2_i32_30, %c0_i32_31] : memref<8x32xf32, #tpu.memory_space<vmem>> -> memref<1x32xf32, #tpu.memory_space<vmem>>
    %71 = tpu.memref_slice %arg16[%c1_i32_28] : memref<2x!tpu.dma_semaphore, #tpu.memory_space<semaphore_mem>> -> memref<1x!tpu.dma_semaphore, #tpu.memory_space<semaphore_mem>>
    %72 = tpu.memref_squeeze %71 : memref<1x!tpu.dma_semaphore, #tpu.memory_space<semaphore_mem>> -> memref<!tpu.dma_semaphore, #tpu.memory_space<semaphore_mem>>
    tpu.enqueue_dma source(%69 : memref<1x32xf32, #tpu.memory_space<any>>) target(%70 : memref<1x32xf32, #tpu.memory_space<vmem>>) target_semaphore(%72 : memref<!tpu.dma_semaphore, #tpu.memory_space<semaphore_mem>>)
    %c0_i32_32 = arith.constant 0 : i32
    %c0_i32_33 = arith.constant 0 : i32
    %73 = tpu.memref_slice %arg3[%21, %c0_i32_33] : memref<11x32xf32, #tpu.memory_space<any>> -> memref<1x32xf32, #tpu.memory_space<any>>
    %c3_i32_34 = arith.constant 3 : i32
    %c0_i32_35 = arith.constant 0 : i32
    %74 = tpu.memref_slice %arg14[%c3_i32_34, %c0_i32_35] : memref<8x32xf32, #tpu.memory_space<vmem>> -> memref<1x32xf32, #tpu.memory_space<vmem>>
    %75 = tpu.memref_slice %arg16[%c0_i32_32] : memref<2x!tpu.dma_semaphore, #tpu.memory_space<semaphore_mem>> -> memref<1x!tpu.dma_semaphore, #tpu.memory_space<semaphore_mem>>
    %76 = tpu.memref_squeeze %75 : memref<1x!tpu.dma_semaphore, #tpu.memory_space<semaphore_mem>> -> memref<!tpu.dma_semaphore, #tpu.memory_space<semaphore_mem>>
    tpu.enqueue_dma source(%73 : memref<1x32xf32, #tpu.memory_space<any>>) target(%74 : memref<1x32xf32, #tpu.memory_space<vmem>>) target_semaphore(%76 : memref<!tpu.dma_semaphore, #tpu.memory_space<semaphore_mem>>)
    %c1_i32_36 = arith.constant 1 : i32
    %c0_i32_37 = arith.constant 0 : i32
    %77 = tpu.memref_slice %arg4[%24, %c0_i32_37] : memref<21x32xf32, #tpu.memory_space<any>> -> memref<1x32xf32, #tpu.memory_space<any>>
    %c3_i32_38 = arith.constant 3 : i32
    %c0_i32_39 = arith.constant 0 : i32
    %78 = tpu.memref_slice %arg15[%c3_i32_38, %c0_i32_39] : memref<8x32xf32, #tpu.memory_space<vmem>> -> memref<1x32xf32, #tpu.memory_space<vmem>>
    %79 = tpu.memref_slice %arg16[%c1_i32_36] : memref<2x!tpu.dma_semaphore, #tpu.memory_space<semaphore_mem>> -> memref<1x!tpu.dma_semaphore, #tpu.memory_space<semaphore_mem>>
    %80 = tpu.memref_squeeze %79 : memref<1x!tpu.dma_semaphore, #tpu.memory_space<semaphore_mem>> -> memref<!tpu.dma_semaphore, #tpu.memory_space<semaphore_mem>>
    tpu.enqueue_dma source(%77 : memref<1x32xf32, #tpu.memory_space<any>>) target(%78 : memref<1x32xf32, #tpu.memory_space<vmem>>) target_semaphore(%80 : memref<!tpu.dma_semaphore, #tpu.memory_space<semaphore_mem>>)
    %c0_i32_40 = arith.constant 0 : i32
    %c0_i32_41 = arith.constant 0 : i32
    %81 = tpu.memref_slice %arg3[%27, %c0_i32_41] : memref<11x32xf32, #tpu.memory_space<any>> -> memref<1x32xf32, #tpu.memory_space<any>>
    %c4_i32_42 = arith.constant 4 : i32
    %c0_i32_43 = arith.constant 0 : i32
    %82 = tpu.memref_slice %arg14[%c4_i32_42, %c0_i32_43] : memref<8x32xf32, #tpu.memory_space<vmem>> -> memref<1x32xf32, #tpu.memory_space<vmem>>
    %83 = tpu.memref_slice %arg16[%c0_i32_40] : memref<2x!tpu.dma_semaphore, #tpu.memory_space<semaphore_mem>> -> memref<1x!tpu.dma_semaphore, #tpu.memory_space<semaphore_mem>>
    %84 = tpu.memref_squeeze %83 : memref<1x!tpu.dma_semaphore, #tpu.memory_space<semaphore_mem>> -> memref<!tpu.dma_semaphore, #tpu.memory_space<semaphore_mem>>
    tpu.enqueue_dma source(%81 : memref<1x32xf32, #tpu.memory_space<any>>) target(%82 : memref<1x32xf32, #tpu.memory_space<vmem>>) target_semaphore(%84 : memref<!tpu.dma_semaphore, #tpu.memory_space<semaphore_mem>>)
    %c1_i32_44 = arith.constant 1 : i32
    %c0_i32_45 = arith.constant 0 : i32
    %85 = tpu.memref_slice %arg4[%30, %c0_i32_45] : memref<21x32xf32, #tpu.memory_space<any>> -> memref<1x32xf32, #tpu.memory_space<any>>
    %c4_i32_46 = arith.constant 4 : i32
    %c0_i32_47 = arith.constant 0 : i32
    %86 = tpu.memref_slice %arg15[%c4_i32_46, %c0_i32_47] : memref<8x32xf32, #tpu.memory_space<vmem>> -> memref<1x32xf32, #tpu.memory_space<vmem>>
    %87 = tpu.memref_slice %arg16[%c1_i32_44] : memref<2x!tpu.dma_semaphore, #tpu.memory_space<semaphore_mem>> -> memref<1x!tpu.dma_semaphore, #tpu.memory_space<semaphore_mem>>
    %88 = tpu.memref_squeeze %87 : memref<1x!tpu.dma_semaphore, #tpu.memory_space<semaphore_mem>> -> memref<!tpu.dma_semaphore, #tpu.memory_space<semaphore_mem>>
    tpu.enqueue_dma source(%85 : memref<1x32xf32, #tpu.memory_space<any>>) target(%86 : memref<1x32xf32, #tpu.memory_space<vmem>>) target_semaphore(%88 : memref<!tpu.dma_semaphore, #tpu.memory_space<semaphore_mem>>)
    %c0_i32_48 = arith.constant 0 : i32
    %c0_i32_49 = arith.constant 0 : i32
    %89 = tpu.memref_slice %arg3[%33, %c0_i32_49] : memref<11x32xf32, #tpu.memory_space<any>> -> memref<1x32xf32, #tpu.memory_space<any>>
    %c5_i32_50 = arith.constant 5 : i32
    %c0_i32_51 = arith.constant 0 : i32
    %90 = tpu.memref_slice %arg14[%c5_i32_50, %c0_i32_51] : memref<8x32xf32, #tpu.memory_space<vmem>> -> memref<1x32xf32, #tpu.memory_space<vmem>>
    %91 = tpu.memref_slice %arg16[%c0_i32_48] : memref<2x!tpu.dma_semaphore, #tpu.memory_space<semaphore_mem>> -> memref<1x!tpu.dma_semaphore, #tpu.memory_space<semaphore_mem>>
    %92 = tpu.memref_squeeze %91 : memref<1x!tpu.dma_semaphore, #tpu.memory_space<semaphore_mem>> -> memref<!tpu.dma_semaphore, #tpu.memory_space<semaphore_mem>>
    tpu.enqueue_dma source(%89 : memref<1x32xf32, #tpu.memory_space<any>>) target(%90 : memref<1x32xf32, #tpu.memory_space<vmem>>) target_semaphore(%92 : memref<!tpu.dma_semaphore, #tpu.memory_space<semaphore_mem>>)
    %c1_i32_52 = arith.constant 1 : i32
    %c0_i32_53 = arith.constant 0 : i32
    %93 = tpu.memref_slice %arg4[%36, %c0_i32_53] : memref<21x32xf32, #tpu.memory_space<any>> -> memref<1x32xf32, #tpu.memory_space<any>>
    %c5_i32_54 = arith.constant 5 : i32
    %c0_i32_55 = arith.constant 0 : i32
    %94 = tpu.memref_slice %arg15[%c5_i32_54, %c0_i32_55] : memref<8x32xf32, #tpu.memory_space<vmem>> -> memref<1x32xf32, #tpu.memory_space<vmem>>
    %95 = tpu.memref_slice %arg16[%c1_i32_52] : memref<2x!tpu.dma_semaphore, #tpu.memory_space<semaphore_mem>> -> memref<1x!tpu.dma_semaphore, #tpu.memory_space<semaphore_mem>>
    %96 = tpu.memref_squeeze %95 : memref<1x!tpu.dma_semaphore, #tpu.memory_space<semaphore_mem>> -> memref<!tpu.dma_semaphore, #tpu.memory_space<semaphore_mem>>
    tpu.enqueue_dma source(%93 : memref<1x32xf32, #tpu.memory_space<any>>) target(%94 : memref<1x32xf32, #tpu.memory_space<vmem>>) target_semaphore(%96 : memref<!tpu.dma_semaphore, #tpu.memory_space<semaphore_mem>>)
    %c0_i32_56 = arith.constant 0 : i32
    %c0_i32_57 = arith.constant 0 : i32
    %97 = tpu.memref_slice %arg3[%39, %c0_i32_57] : memref<11x32xf32, #tpu.memory_space<any>> -> memref<1x32xf32, #tpu.memory_space<any>>
    %c6_i32_58 = arith.constant 6 : i32
    %c0_i32_59 = arith.constant 0 : i32
    %98 = tpu.memref_slice %arg14[%c6_i32_58, %c0_i32_59] : memref<8x32xf32, #tpu.memory_space<vmem>> -> memref<1x32xf32, #tpu.memory_space<vmem>>
    %99 = tpu.memref_slice %arg16[%c0_i32_56] : memref<2x!tpu.dma_semaphore, #tpu.memory_space<semaphore_mem>> -> memref<1x!tpu.dma_semaphore, #tpu.memory_space<semaphore_mem>>
    %100 = tpu.memref_squeeze %99 : memref<1x!tpu.dma_semaphore, #tpu.memory_space<semaphore_mem>> -> memref<!tpu.dma_semaphore, #tpu.memory_space<semaphore_mem>>
    tpu.enqueue_dma source(%97 : memref<1x32xf32, #tpu.memory_space<any>>) target(%98 : memref<1x32xf32, #tpu.memory_space<vmem>>) target_semaphore(%100 : memref<!tpu.dma_semaphore, #tpu.memory_space<semaphore_mem>>)
    %c1_i32_60 = arith.constant 1 : i32
    %c0_i32_61 = arith.constant 0 : i32
    %101 = tpu.memref_slice %arg4[%42, %c0_i32_61] : memref<21x32xf32, #tpu.memory_space<any>> -> memref<1x32xf32, #tpu.memory_space<any>>
    %c6_i32_62 = arith.constant 6 : i32
    %c0_i32_63 = arith.constant 0 : i32
    %102 = tpu.memref_slice %arg15[%c6_i32_62, %c0_i32_63] : memref<8x32xf32, #tpu.memory_space<vmem>> -> memref<1x32xf32, #tpu.memory_space<vmem>>
    %103 = tpu.memref_slice %arg16[%c1_i32_60] : memref<2x!tpu.dma_semaphore, #tpu.memory_space<semaphore_mem>> -> memref<1x!tpu.dma_semaphore, #tpu.memory_space<semaphore_mem>>
    %104 = tpu.memref_squeeze %103 : memref<1x!tpu.dma_semaphore, #tpu.memory_space<semaphore_mem>> -> memref<!tpu.dma_semaphore, #tpu.memory_space<semaphore_mem>>
    tpu.enqueue_dma source(%101 : memref<1x32xf32, #tpu.memory_space<any>>) target(%102 : memref<1x32xf32, #tpu.memory_space<vmem>>) target_semaphore(%104 : memref<!tpu.dma_semaphore, #tpu.memory_space<semaphore_mem>>)
    %c0_i32_64 = arith.constant 0 : i32
    %c0_i32_65 = arith.constant 0 : i32
    %105 = tpu.memref_slice %arg3[%45, %c0_i32_65] : memref<11x32xf32, #tpu.memory_space<any>> -> memref<1x32xf32, #tpu.memory_space<any>>
    %c7_i32_66 = arith.constant 7 : i32
    %c0_i32_67 = arith.constant 0 : i32
    %106 = tpu.memref_slice %arg14[%c7_i32_66, %c0_i32_67] : memref<8x32xf32, #tpu.memory_space<vmem>> -> memref<1x32xf32, #tpu.memory_space<vmem>>
    %107 = tpu.memref_slice %arg16[%c0_i32_64] : memref<2x!tpu.dma_semaphore, #tpu.memory_space<semaphore_mem>> -> memref<1x!tpu.dma_semaphore, #tpu.memory_space<semaphore_mem>>
    %108 = tpu.memref_squeeze %107 : memref<1x!tpu.dma_semaphore, #tpu.memory_space<semaphore_mem>> -> memref<!tpu.dma_semaphore, #tpu.memory_space<semaphore_mem>>
    tpu.enqueue_dma source(%105 : memref<1x32xf32, #tpu.memory_space<any>>) target(%106 : memref<1x32xf32, #tpu.memory_space<vmem>>) target_semaphore(%108 : memref<!tpu.dma_semaphore, #tpu.memory_space<semaphore_mem>>)
    %c1_i32_68 = arith.constant 1 : i32
    %c0_i32_69 = arith.constant 0 : i32
    %109 = tpu.memref_slice %arg4[%48, %c0_i32_69] : memref<21x32xf32, #tpu.memory_space<any>> -> memref<1x32xf32, #tpu.memory_space<any>>
    %c7_i32_70 = arith.constant 7 : i32
    %c0_i32_71 = arith.constant 0 : i32
    %110 = tpu.memref_slice %arg15[%c7_i32_70, %c0_i32_71] : memref<8x32xf32, #tpu.memory_space<vmem>> -> memref<1x32xf32, #tpu.memory_space<vmem>>
    %111 = tpu.memref_slice %arg16[%c1_i32_68] : memref<2x!tpu.dma_semaphore, #tpu.memory_space<semaphore_mem>> -> memref<1x!tpu.dma_semaphore, #tpu.memory_space<semaphore_mem>>
    %112 = tpu.memref_squeeze %111 : memref<1x!tpu.dma_semaphore, #tpu.memory_space<semaphore_mem>> -> memref<!tpu.dma_semaphore, #tpu.memory_space<semaphore_mem>>
    tpu.enqueue_dma source(%109 : memref<1x32xf32, #tpu.memory_space<any>>) target(%110 : memref<1x32xf32, #tpu.memory_space<vmem>>) target_semaphore(%112 : memref<!tpu.dma_semaphore, #tpu.memory_space<semaphore_mem>>)
    %c0_i32_72 = arith.constant 0 : i32
    %c0_i32_73 = arith.constant 0 : i32
    %113 = tpu.memref_slice %arg3[%3, %c0_i32_73] : memref<11x32xf32, #tpu.memory_space<any>> -> memref<1x32xf32, #tpu.memory_space<any>>
    %c0_i32_74 = arith.constant 0 : i32
    %c0_i32_75 = arith.constant 0 : i32
    %114 = tpu.memref_slice %arg14[%c0_i32_74, %c0_i32_75] : memref<8x32xf32, #tpu.memory_space<vmem>> -> memref<1x32xf32, #tpu.memory_space<vmem>>
    %115 = tpu.memref_slice %arg16[%c0_i32_72] : memref<2x!tpu.dma_semaphore, #tpu.memory_space<semaphore_mem>> -> memref<1x!tpu.dma_semaphore, #tpu.memory_space<semaphore_mem>>
    %116 = tpu.memref_squeeze %115 : memref<1x!tpu.dma_semaphore, #tpu.memory_space<semaphore_mem>> -> memref<!tpu.dma_semaphore, #tpu.memory_space<semaphore_mem>>
    tpu.wait_dma2 semaphore(%116 : memref<!tpu.dma_semaphore, #tpu.memory_space<semaphore_mem>>) src(%113 : memref<1x32xf32, #tpu.memory_space<any>>) dst(%114 : memref<1x32xf32, #tpu.memory_space<vmem>>)
    %c1_i32_76 = arith.constant 1 : i32
    %c0_i32_77 = arith.constant 0 : i32
    %117 = tpu.memref_slice %arg4[%6, %c0_i32_77] : memref<21x32xf32, #tpu.memory_space<any>> -> memref<1x32xf32, #tpu.memory_space<any>>
    %c0_i32_78 = arith.constant 0 : i32
    %c0_i32_79 = arith.constant 0 : i32
    %118 = tpu.memref_slice %arg15[%c0_i32_78, %c0_i32_79] : memref<8x32xf32, #tpu.memory_space<vmem>> -> memref<1x32xf32, #tpu.memory_space<vmem>>
    %119 = tpu.memref_slice %arg16[%c1_i32_76] : memref<2x!tpu.dma_semaphore, #tpu.memory_space<semaphore_mem>> -> memref<1x!tpu.dma_semaphore, #tpu.memory_space<semaphore_mem>>
    %120 = tpu.memref_squeeze %119 : memref<1x!tpu.dma_semaphore, #tpu.memory_space<semaphore_mem>> -> memref<!tpu.dma_semaphore, #tpu.memory_space<semaphore_mem>>
    tpu.wait_dma2 semaphore(%120 : memref<!tpu.dma_semaphore, #tpu.memory_space<semaphore_mem>>) src(%117 : memref<1x32xf32, #tpu.memory_space<any>>) dst(%118 : memref<1x32xf32, #tpu.memory_space<vmem>>)
    %c0_i32_80 = arith.constant 0 : i32
    %c0_i32_81 = arith.constant 0 : i32
    %121 = tpu.memref_slice %arg3[%9, %c0_i32_81] : memref<11x32xf32, #tpu.memory_space<any>> -> memref<1x32xf32, #tpu.memory_space<any>>
    %c1_i32_82 = arith.constant 1 : i32
    %c0_i32_83 = arith.constant 0 : i32
    %122 = tpu.memref_slice %arg14[%c1_i32_82, %c0_i32_83] : memref<8x32xf32, #tpu.memory_space<vmem>> -> memref<1x32xf32, #tpu.memory_space<vmem>>
    %123 = tpu.memref_slice %arg16[%c0_i32_80] : memref<2x!tpu.dma_semaphore, #tpu.memory_space<semaphore_mem>> -> memref<1x!tpu.dma_semaphore, #tpu.memory_space<semaphore_mem>>
    %124 = tpu.memref_squeeze %123 : memref<1x!tpu.dma_semaphore, #tpu.memory_space<semaphore_mem>> -> memref<!tpu.dma_semaphore, #tpu.memory_space<semaphore_mem>>
    tpu.wait_dma2 semaphore(%124 : memref<!tpu.dma_semaphore, #tpu.memory_space<semaphore_mem>>) src(%121 : memref<1x32xf32, #tpu.memory_space<any>>) dst(%122 : memref<1x32xf32, #tpu.memory_space<vmem>>)
    %c1_i32_84 = arith.constant 1 : i32
    %c0_i32_85 = arith.constant 0 : i32
    %125 = tpu.memref_slice %arg4[%12, %c0_i32_85] : memref<21x32xf32, #tpu.memory_space<any>> -> memref<1x32xf32, #tpu.memory_space<any>>
    %c1_i32_86 = arith.constant 1 : i32
    %c0_i32_87 = arith.constant 0 : i32
    %126 = tpu.memref_slice %arg15[%c1_i32_86, %c0_i32_87] : memref<8x32xf32, #tpu.memory_space<vmem>> -> memref<1x32xf32, #tpu.memory_space<vmem>>
    %127 = tpu.memref_slice %arg16[%c1_i32_84] : memref<2x!tpu.dma_semaphore, #tpu.memory_space<semaphore_mem>> -> memref<1x!tpu.dma_semaphore, #tpu.memory_space<semaphore_mem>>
    %128 = tpu.memref_squeeze %127 : memref<1x!tpu.dma_semaphore, #tpu.memory_space<semaphore_mem>> -> memref<!tpu.dma_semaphore, #tpu.memory_space<semaphore_mem>>
    tpu.wait_dma2 semaphore(%128 : memref<!tpu.dma_semaphore, #tpu.memory_space<semaphore_mem>>) src(%125 : memref<1x32xf32, #tpu.memory_space<any>>) dst(%126 : memref<1x32xf32, #tpu.memory_space<vmem>>)
    %c0_i32_88 = arith.constant 0 : i32
    %c0_i32_89 = arith.constant 0 : i32
    %129 = tpu.memref_slice %arg3[%15, %c0_i32_89] : memref<11x32xf32, #tpu.memory_space<any>> -> memref<1x32xf32, #tpu.memory_space<any>>
    %c2_i32_90 = arith.constant 2 : i32
    %c0_i32_91 = arith.constant 0 : i32
    %130 = tpu.memref_slice %arg14[%c2_i32_90, %c0_i32_91] : memref<8x32xf32, #tpu.memory_space<vmem>> -> memref<1x32xf32, #tpu.memory_space<vmem>>
    %131 = tpu.memref_slice %arg16[%c0_i32_88] : memref<2x!tpu.dma_semaphore, #tpu.memory_space<semaphore_mem>> -> memref<1x!tpu.dma_semaphore, #tpu.memory_space<semaphore_mem>>
    %132 = tpu.memref_squeeze %131 : memref<1x!tpu.dma_semaphore, #tpu.memory_space<semaphore_mem>> -> memref<!tpu.dma_semaphore, #tpu.memory_space<semaphore_mem>>
    tpu.wait_dma2 semaphore(%132 : memref<!tpu.dma_semaphore, #tpu.memory_space<semaphore_mem>>) src(%129 : memref<1x32xf32, #tpu.memory_space<any>>) dst(%130 : memref<1x32xf32, #tpu.memory_space<vmem>>)
    %c1_i32_92 = arith.constant 1 : i32
    %c0_i32_93 = arith.constant 0 : i32
    %133 = tpu.memref_slice %arg4[%18, %c0_i32_93] : memref<21x32xf32, #tpu.memory_space<any>> -> memref<1x32xf32, #tpu.memory_space<any>>
    %c2_i32_94 = arith.constant 2 : i32
    %c0_i32_95 = arith.constant 0 : i32
    %134 = tpu.memref_slice %arg15[%c2_i32_94, %c0_i32_95] : memref<8x32xf32, #tpu.memory_space<vmem>> -> memref<1x32xf32, #tpu.memory_space<vmem>>
    %135 = tpu.memref_slice %arg16[%c1_i32_92] : memref<2x!tpu.dma_semaphore, #tpu.memory_space<semaphore_mem>> -> memref<1x!tpu.dma_semaphore, #tpu.memory_space<semaphore_mem>>
    %136 = tpu.memref_squeeze %135 : memref<1x!tpu.dma_semaphore, #tpu.memory_space<semaphore_mem>> -> memref<!tpu.dma_semaphore, #tpu.memory_space<semaphore_mem>>
    tpu.wait_dma2 semaphore(%136 : memref<!tpu.dma_semaphore, #tpu.memory_space<semaphore_mem>>) src(%133 : memref<1x32xf32, #tpu.memory_space<any>>) dst(%134 : memref<1x32xf32, #tpu.memory_space<vmem>>)
    %c0_i32_96 = arith.constant 0 : i32
    %c0_i32_97 = arith.constant 0 : i32
    %137 = tpu.memref_slice %arg3[%21, %c0_i32_97] : memref<11x32xf32, #tpu.memory_space<any>> -> memref<1x32xf32, #tpu.memory_space<any>>
    %c3_i32_98 = arith.constant 3 : i32
    %c0_i32_99 = arith.constant 0 : i32
    %138 = tpu.memref_slice %arg14[%c3_i32_98, %c0_i32_99] : memref<8x32xf32, #tpu.memory_space<vmem>> -> memref<1x32xf32, #tpu.memory_space<vmem>>
    %139 = tpu.memref_slice %arg16[%c0_i32_96] : memref<2x!tpu.dma_semaphore, #tpu.memory_space<semaphore_mem>> -> memref<1x!tpu.dma_semaphore, #tpu.memory_space<semaphore_mem>>
    %140 = tpu.memref_squeeze %139 : memref<1x!tpu.dma_semaphore, #tpu.memory_space<semaphore_mem>> -> memref<!tpu.dma_semaphore, #tpu.memory_space<semaphore_mem>>
    tpu.wait_dma2 semaphore(%140 : memref<!tpu.dma_semaphore, #tpu.memory_space<semaphore_mem>>) src(%137 : memref<1x32xf32, #tpu.memory_space<any>>) dst(%138 : memref<1x32xf32, #tpu.memory_space<vmem>>)
    %c1_i32_100 = arith.constant 1 : i32
    %c0_i32_101 = arith.constant 0 : i32
    %141 = tpu.memref_slice %arg4[%24, %c0_i32_101] : memref<21x32xf32, #tpu.memory_space<any>> -> memref<1x32xf32, #tpu.memory_space<any>>
    %c3_i32_102 = arith.constant 3 : i32
    %c0_i32_103 = arith.constant 0 : i32
    %142 = tpu.memref_slice %arg15[%c3_i32_102, %c0_i32_103] : memref<8x32xf32, #tpu.memory_space<vmem>> -> memref<1x32xf32, #tpu.memory_space<vmem>>
    %143 = tpu.memref_slice %arg16[%c1_i32_100] : memref<2x!tpu.dma_semaphore, #tpu.memory_space<semaphore_mem>> -> memref<1x!tpu.dma_semaphore, #tpu.memory_space<semaphore_mem>>
    %144 = tpu.memref_squeeze %143 : memref<1x!tpu.dma_semaphore, #tpu.memory_space<semaphore_mem>> -> memref<!tpu.dma_semaphore, #tpu.memory_space<semaphore_mem>>
    tpu.wait_dma2 semaphore(%144 : memref<!tpu.dma_semaphore, #tpu.memory_space<semaphore_mem>>) src(%141 : memref<1x32xf32, #tpu.memory_space<any>>) dst(%142 : memref<1x32xf32, #tpu.memory_space<vmem>>)
    %c0_i32_104 = arith.constant 0 : i32
    %c0_i32_105 = arith.constant 0 : i32
    %145 = tpu.memref_slice %arg3[%27, %c0_i32_105] : memref<11x32xf32, #tpu.memory_space<any>> -> memref<1x32xf32, #tpu.memory_space<any>>
    %c4_i32_106 = arith.constant 4 : i32
    %c0_i32_107 = arith.constant 0 : i32
    %146 = tpu.memref_slice %arg14[%c4_i32_106, %c0_i32_107] : memref<8x32xf32, #tpu.memory_space<vmem>> -> memref<1x32xf32, #tpu.memory_space<vmem>>
    %147 = tpu.memref_slice %arg16[%c0_i32_104] : memref<2x!tpu.dma_semaphore, #tpu.memory_space<semaphore_mem>> -> memref<1x!tpu.dma_semaphore, #tpu.memory_space<semaphore_mem>>
    %148 = tpu.memref_squeeze %147 : memref<1x!tpu.dma_semaphore, #tpu.memory_space<semaphore_mem>> -> memref<!tpu.dma_semaphore, #tpu.memory_space<semaphore_mem>>
    tpu.wait_dma2 semaphore(%148 : memref<!tpu.dma_semaphore, #tpu.memory_space<semaphore_mem>>) src(%145 : memref<1x32xf32, #tpu.memory_space<any>>) dst(%146 : memref<1x32xf32, #tpu.memory_space<vmem>>)
    %c1_i32_108 = arith.constant 1 : i32
    %c0_i32_109 = arith.constant 0 : i32
    %149 = tpu.memref_slice %arg4[%30, %c0_i32_109] : memref<21x32xf32, #tpu.memory_space<any>> -> memref<1x32xf32, #tpu.memory_space<any>>
    %c4_i32_110 = arith.constant 4 : i32
    %c0_i32_111 = arith.constant 0 : i32
    %150 = tpu.memref_slice %arg15[%c4_i32_110, %c0_i32_111] : memref<8x32xf32, #tpu.memory_space<vmem>> -> memref<1x32xf32, #tpu.memory_space<vmem>>
    %151 = tpu.memref_slice %arg16[%c1_i32_108] : memref<2x!tpu.dma_semaphore, #tpu.memory_space<semaphore_mem>> -> memref<1x!tpu.dma_semaphore, #tpu.memory_space<semaphore_mem>>
    %152 = tpu.memref_squeeze %151 : memref<1x!tpu.dma_semaphore, #tpu.memory_space<semaphore_mem>> -> memref<!tpu.dma_semaphore, #tpu.memory_space<semaphore_mem>>
    tpu.wait_dma2 semaphore(%152 : memref<!tpu.dma_semaphore, #tpu.memory_space<semaphore_mem>>) src(%149 : memref<1x32xf32, #tpu.memory_space<any>>) dst(%150 : memref<1x32xf32, #tpu.memory_space<vmem>>)
    %c0_i32_112 = arith.constant 0 : i32
    %c0_i32_113 = arith.constant 0 : i32
    %153 = tpu.memref_slice %arg3[%33, %c0_i32_113] : memref<11x32xf32, #tpu.memory_space<any>> -> memref<1x32xf32, #tpu.memory_space<any>>
    %c5_i32_114 = arith.constant 5 : i32
    %c0_i32_115 = arith.constant 0 : i32
    %154 = tpu.memref_slice %arg14[%c5_i32_114, %c0_i32_115] : memref<8x32xf32, #tpu.memory_space<vmem>> -> memref<1x32xf32, #tpu.memory_space<vmem>>
    %155 = tpu.memref_slice %arg16[%c0_i32_112] : memref<2x!tpu.dma_semaphore, #tpu.memory_space<semaphore_mem>> -> memref<1x!tpu.dma_semaphore, #tpu.memory_space<semaphore_mem>>
    %156 = tpu.memref_squeeze %155 : memref<1x!tpu.dma_semaphore, #tpu.memory_space<semaphore_mem>> -> memref<!tpu.dma_semaphore, #tpu.memory_space<semaphore_mem>>
    tpu.wait_dma2 semaphore(%156 : memref<!tpu.dma_semaphore, #tpu.memory_space<semaphore_mem>>) src(%153 : memref<1x32xf32, #tpu.memory_space<any>>) dst(%154 : memref<1x32xf32, #tpu.memory_space<vmem>>)
    %c1_i32_116 = arith.constant 1 : i32
    %c0_i32_117 = arith.constant 0 : i32
    %157 = tpu.memref_slice %arg4[%36, %c0_i32_117] : memref<21x32xf32, #tpu.memory_space<any>> -> memref<1x32xf32, #tpu.memory_space<any>>
    %c5_i32_118 = arith.constant 5 : i32
    %c0_i32_119 = arith.constant 0 : i32
    %158 = tpu.memref_slice %arg15[%c5_i32_118, %c0_i32_119] : memref<8x32xf32, #tpu.memory_space<vmem>> -> memref<1x32xf32, #tpu.memory_space<vmem>>
    %159 = tpu.memref_slice %arg16[%c1_i32_116] : memref<2x!tpu.dma_semaphore, #tpu.memory_space<semaphore_mem>> -> memref<1x!tpu.dma_semaphore, #tpu.memory_space<semaphore_mem>>
    %160 = tpu.memref_squeeze %159 : memref<1x!tpu.dma_semaphore, #tpu.memory_space<semaphore_mem>> -> memref<!tpu.dma_semaphore, #tpu.memory_space<semaphore_mem>>
    tpu.wait_dma2 semaphore(%160 : memref<!tpu.dma_semaphore, #tpu.memory_space<semaphore_mem>>) src(%157 : memref<1x32xf32, #tpu.memory_space<any>>) dst(%158 : memref<1x32xf32, #tpu.memory_space<vmem>>)
    %c0_i32_120 = arith.constant 0 : i32
    %c0_i32_121 = arith.constant 0 : i32
    %161 = tpu.memref_slice %arg3[%39, %c0_i32_121] : memref<11x32xf32, #tpu.memory_space<any>> -> memref<1x32xf32, #tpu.memory_space<any>>
    %c6_i32_122 = arith.constant 6 : i32
    %c0_i32_123 = arith.constant 0 : i32
    %162 = tpu.memref_slice %arg14[%c6_i32_122, %c0_i32_123] : memref<8x32xf32, #tpu.memory_space<vmem>> -> memref<1x32xf32, #tpu.memory_space<vmem>>
    %163 = tpu.memref_slice %arg16[%c0_i32_120] : memref<2x!tpu.dma_semaphore, #tpu.memory_space<semaphore_mem>> -> memref<1x!tpu.dma_semaphore, #tpu.memory_space<semaphore_mem>>
    %164 = tpu.memref_squeeze %163 : memref<1x!tpu.dma_semaphore, #tpu.memory_space<semaphore_mem>> -> memref<!tpu.dma_semaphore, #tpu.memory_space<semaphore_mem>>
    tpu.wait_dma2 semaphore(%164 : memref<!tpu.dma_semaphore, #tpu.memory_space<semaphore_mem>>) src(%161 : memref<1x32xf32, #tpu.memory_space<any>>) dst(%162 : memref<1x32xf32, #tpu.memory_space<vmem>>)
    %c1_i32_124 = arith.constant 1 : i32
    %c0_i32_125 = arith.constant 0 : i32
    %165 = tpu.memref_slice %arg4[%42, %c0_i32_125] : memref<21x32xf32, #tpu.memory_space<any>> -> memref<1x32xf32, #tpu.memory_space<any>>
    %c6_i32_126 = arith.constant 6 : i32
    %c0_i32_127 = arith.constant 0 : i32
    %166 = tpu.memref_slice %arg15[%c6_i32_126, %c0_i32_127] : memref<8x32xf32, #tpu.memory_space<vmem>> -> memref<1x32xf32, #tpu.memory_space<vmem>>
    %167 = tpu.memref_slice %arg16[%c1_i32_124] : memref<2x!tpu.dma_semaphore, #tpu.memory_space<semaphore_mem>> -> memref<1x!tpu.dma_semaphore, #tpu.memory_space<semaphore_mem>>
    %168 = tpu.memref_squeeze %167 : memref<1x!tpu.dma_semaphore, #tpu.memory_space<semaphore_mem>> -> memref<!tpu.dma_semaphore, #tpu.memory_space<semaphore_mem>>
    tpu.wait_dma2 semaphore(%168 : memref<!tpu.dma_semaphore, #tpu.memory_space<semaphore_mem>>) src(%165 : memref<1x32xf32, #tpu.memory_space<any>>) dst(%166 : memref<1x32xf32, #tpu.memory_space<vmem>>)
    %c0_i32_128 = arith.constant 0 : i32
    %c0_i32_129 = arith.constant 0 : i32
    %169 = tpu.memref_slice %arg3[%45, %c0_i32_129] : memref<11x32xf32, #tpu.memory_space<any>> -> memref<1x32xf32, #tpu.memory_space<any>>
    %c7_i32_130 = arith.constant 7 : i32
    %c0_i32_131 = arith.constant 0 : i32
    %170 = tpu.memref_slice %arg14[%c7_i32_130, %c0_i32_131] : memref<8x32xf32, #tpu.memory_space<vmem>> -> memref<1x32xf32, #tpu.memory_space<vmem>>
    %171 = tpu.memref_slice %arg16[%c0_i32_128] : memref<2x!tpu.dma_semaphore, #tpu.memory_space<semaphore_mem>> -> memref<1x!tpu.dma_semaphore, #tpu.memory_space<semaphore_mem>>
    %172 = tpu.memref_squeeze %171 : memref<1x!tpu.dma_semaphore, #tpu.memory_space<semaphore_mem>> -> memref<!tpu.dma_semaphore, #tpu.memory_space<semaphore_mem>>
    tpu.wait_dma2 semaphore(%172 : memref<!tpu.dma_semaphore, #tpu.memory_space<semaphore_mem>>) src(%169 : memref<1x32xf32, #tpu.memory_space<any>>) dst(%170 : memref<1x32xf32, #tpu.memory_space<vmem>>)
    %c1_i32_132 = arith.constant 1 : i32
    %c0_i32_133 = arith.constant 0 : i32
    %173 = tpu.memref_slice %arg4[%48, %c0_i32_133] : memref<21x32xf32, #tpu.memory_space<any>> -> memref<1x32xf32, #tpu.memory_space<any>>
    %c7_i32_134 = arith.constant 7 : i32
    %c0_i32_135 = arith.constant 0 : i32
    %174 = tpu.memref_slice %arg15[%c7_i32_134, %c0_i32_135] : memref<8x32xf32, #tpu.memory_space<vmem>> -> memref<1x32xf32, #tpu.memory_space<vmem>>
    %175 = tpu.memref_slice %arg16[%c1_i32_132] : memref<2x!tpu.dma_semaphore, #tpu.memory_space<semaphore_mem>> -> memref<1x!tpu.dma_semaphore, #tpu.memory_space<semaphore_mem>>
    %176 = tpu.memref_squeeze %175 : memref<1x!tpu.dma_semaphore, #tpu.memory_space<semaphore_mem>> -> memref<!tpu.dma_semaphore, #tpu.memory_space<semaphore_mem>>
    tpu.wait_dma2 semaphore(%176 : memref<!tpu.dma_semaphore, #tpu.memory_space<semaphore_mem>>) src(%173 : memref<1x32xf32, #tpu.memory_space<any>>) dst(%174 : memref<1x32xf32, #tpu.memory_space<vmem>>)
    %c0 = arith.constant 0 : index
    %c0_136 = arith.constant 0 : index
    %177 = vector.load %arg14[%c0, %c0_136] : memref<8x32xf32, #tpu.memory_space<vmem>>, vector<8x32xf32>
    %c0_137 = arith.constant 0 : index
    %c0_138 = arith.constant 0 : index
    %178 = vector.load %arg15[%c0_137, %c0_138] : memref<8x32xf32, #tpu.memory_space<vmem>>, vector<8x32xf32>
    %179 = vector.extract_strided_slice %177 {offsets = [0, 0], sizes = [8, 16], strides = [1, 1]} : vector<8x32xf32> to vector<8x16xf32>
    %180 = vector.extract_strided_slice %178 {offsets = [0, 0], sizes = [8, 16], strides = [1, 1]} : vector<8x32xf32> to vector<8x16xf32>
    %181 = arith.mulf %179, %180 : vector<8x16xf32>
    %182 = vector.extract_strided_slice %177 {offsets = [0, 16], sizes = [8, 16], strides = [1, 1]} : vector<8x32xf32> to vector<8x16xf32>
    %183 = vector.extract_strided_slice %178 {offsets = [0, 16], sizes = [8, 16], strides = [1, 1]} : vector<8x32xf32> to vector<8x16xf32>
    %c0_139 = arith.constant 0 : index
    %c0_140 = arith.constant 0 : index
    %184 = vector.load %arg5[%c0_139, %c0_140] : memref<16x128xf32, #tpu.memory_space<vmem>>, vector<16x128xf32>
    %cst = arith.constant dense<0.000000e+00> : vector<8x128xf32>
    %185 = tpu.matmul %182, %184, %cst {dimension_numbers = #tpu.dot_dimension_numbers<[1], [0], [0], [1], [0, 0, 1, 1], [], []>} : vector<8x16xf32>, vector<16x128xf32>, vector<8x128xf32> -> vector<8x128xf32>
    %c0_141 = arith.constant 0 : index
    %c0_142 = arith.constant 0 : index
    %186 = vector.load %arg6[%c0_141, %c0_142] : memref<16x128xf32, #tpu.memory_space<vmem>>, vector<16x128xf32>
    %cst_143 = arith.constant dense<0.000000e+00> : vector<8x128xf32>
    %187 = tpu.matmul %183, %186, %cst_143 {dimension_numbers = #tpu.dot_dimension_numbers<[1], [0], [0], [1], [0, 0, 1, 1], [], []>} : vector<8x16xf32>, vector<16x128xf32>, vector<8x128xf32> -> vector<8x128xf32>
    %188 = arith.addf %185, %187 : vector<8x128xf32>
    %c0_144 = arith.constant 0 : index
    %c0_145 = arith.constant 0 : index
    %189 = vector.load %arg7[%c0_144, %c0_145] : memref<1x128xf32, #tpu.memory_space<vmem>>, vector<1x128xf32>
    %190 = vector.broadcast %189 : vector<1x128xf32> to vector<8x128xf32>
    %191 = arith.addf %188, %190 : vector<8x128xf32>
    %cst_146 = arith.constant 0.000000e+00 : f32
    %192 = vector.broadcast %cst_146 : f32 to vector<8x128xf32>
    %193 = arith.maximumf %191, %192 : vector<8x128xf32>
    %c0_147 = arith.constant 0 : index
    %c0_148 = arith.constant 0 : index
    %194 = vector.load %arg8[%c0_147, %c0_148] : memref<128x16xf32, #tpu.memory_space<vmem>>, vector<128x16xf32>
    %cst_149 = arith.constant dense<0.000000e+00> : vector<8x16xf32>
    %195 = tpu.matmul %193, %194, %cst_149 {dimension_numbers = #tpu.dot_dimension_numbers<[1], [0], [0], [1], [0, 0, 1, 1], [], []>} : vector<8x128xf32>, vector<128x16xf32>, vector<8x16xf32> -> vector<8x16xf32>
    %c0_150 = arith.constant 0 : index
    %c0_151 = arith.constant 0 : index
    %196 = vector.load %arg9[%c0_150, %c0_151] : memref<1x16xf32, #tpu.memory_space<vmem>>, vector<1x16xf32>
    %197 = vector.broadcast %196 : vector<1x16xf32> to vector<8x16xf32>
    %198 = arith.addf %195, %197 : vector<8x16xf32>
    %cst_152 = arith.constant 0.000000e+00 : f32
    %199 = vector.broadcast %cst_152 : f32 to vector<8x16xf32>
    %200 = arith.maximumf %198, %199 : vector<8x16xf32>
    %c0_153 = arith.constant 0 : index
    %c0_154 = arith.constant 0 : index
    %201 = vector.load %arg10[%c0_153, %c0_154] : memref<1x16xf32, #tpu.memory_space<vmem>>, vector<1x16xf32>
    %202 = vector.broadcast %201 : vector<1x16xf32> to vector<8x16xf32>
    %203 = arith.mulf %181, %202 : vector<8x16xf32>
    %c0_155 = arith.constant 0 : index
    %c0_156 = arith.constant 0 : index
    %204 = vector.load %arg11[%c0_155, %c0_156] : memref<1x16xf32, #tpu.memory_space<vmem>>, vector<1x16xf32>
    %205 = vector.broadcast %204 : vector<1x16xf32> to vector<8x16xf32>
    %206 = arith.mulf %200, %205 : vector<8x16xf32>
    %207 = arith.addf %203, %206 : vector<8x16xf32>
    %cst_157 = arith.constant dense<0.000000e+00> : vector<8xf32>
    %208 = vector.multi_reduction <add>, %207, %cst_157 [1] : vector<8x16xf32> to vector<8xf32>
    %209 = vector.shape_cast %208 : vector<8xf32> to vector<8x1xf32>
    %c0_158 = arith.constant 0 : index
    %c0_159 = arith.constant 0 : index
    %210 = vector.load %arg12[%c0_158, %c0_159] : memref<1x1xf32, #tpu.memory_space<vmem>>, vector<1x1xf32>
    %211 = vector.broadcast %210 : vector<1x1xf32> to vector<8x1xf32>
    %212 = arith.addf %209, %211 : vector<8x1xf32>
    %213 = arith.negf %212 : vector<8x1xf32>
    %214 = math.exp %213 : vector<8x1xf32>
    %cst_160 = arith.constant 1.000000e+00 : f32
    %215 = vector.broadcast %cst_160 : f32 to vector<8x1xf32>
    %216 = arith.addf %215, %214 : vector<8x1xf32>
    %217 = arith.divf %215, %216 : vector<8x1xf32>
    %c0_161 = arith.constant 0 : index
    %c0_162 = arith.constant 0 : index
    %218 = vector.load %arg13[%c0_161, %c0_162] : memref<8x1xf32, #tpu.memory_space<vmem>>, vector<8x1xf32>
    tpu.vector_store %arg13[%c0_161, %c0_162], %217 {strides = array<i32>} : memref<8x1xf32, #tpu.memory_space<vmem>>, vector<8x1xf32>,
    return
  }
  func.func @transform_2(%arg0: i32, %arg1: memref<16xi32, #tpu.memory_space<smem>>, %arg2: memref<16xi32, #tpu.memory_space<smem>>) -> (i32, i32) {
    %c0_i32 = arith.constant 0 : i32
    %c0_i32_0 = arith.constant 0 : i32
    %c0_i32_1 = arith.constant 0 : i32
    return %c0_i32, %c0_i32_0 : i32, i32
  }
  func.func @transform_3(%arg0: i32, %arg1: memref<16xi32, #tpu.memory_space<smem>>, %arg2: memref<16xi32, #tpu.memory_space<smem>>) -> (i32, i32) {
    %c0_i32 = arith.constant 0 : i32
    %c0_i32_0 = arith.constant 0 : i32
    %c0_i32_1 = arith.constant 0 : i32
    return %c0_i32, %c0_i32_0 : i32, i32
  }
  func.func @transform_4(%arg0: i32, %arg1: memref<16xi32, #tpu.memory_space<smem>>, %arg2: memref<16xi32, #tpu.memory_space<smem>>) -> (i32, i32) {
    %c0_i32 = arith.constant 0 : i32
    %c0_i32_0 = arith.constant 0 : i32
    %c0_i32_1 = arith.constant 0 : i32
    return %c0_i32, %c0_i32_0 : i32, i32
  }
  func.func @transform_5(%arg0: i32, %arg1: memref<16xi32, #tpu.memory_space<smem>>, %arg2: memref<16xi32, #tpu.memory_space<smem>>) -> (i32, i32) {
    %c0_i32 = arith.constant 0 : i32
    %c0_i32_0 = arith.constant 0 : i32
    %c0_i32_1 = arith.constant 0 : i32
    return %c0_i32, %c0_i32_0 : i32, i32
  }
  func.func @transform_6(%arg0: i32, %arg1: memref<16xi32, #tpu.memory_space<smem>>, %arg2: memref<16xi32, #tpu.memory_space<smem>>) -> (i32, i32) {
    %c0_i32 = arith.constant 0 : i32
    %c0_i32_0 = arith.constant 0 : i32
    %c0_i32_1 = arith.constant 0 : i32
    return %c0_i32, %c0_i32_0 : i32, i32
  }
  func.func @transform_7(%arg0: i32, %arg1: memref<16xi32, #tpu.memory_space<smem>>, %arg2: memref<16xi32, #tpu.memory_space<smem>>) -> (i32, i32) {
    %c0_i32 = arith.constant 0 : i32
    %c0_i32_0 = arith.constant 0 : i32
    %c0_i32_1 = arith.constant 0 : i32
    return %c0_i32, %c0_i32_0 : i32, i32
  }
  func.func @transform_8(%arg0: i32, %arg1: memref<16xi32, #tpu.memory_space<smem>>, %arg2: memref<16xi32, #tpu.memory_space<smem>>) -> (i32, i32) {
    %c0_i32 = arith.constant 0 : i32
    %c0_i32_0 = arith.constant 0 : i32
    %c0_i32_1 = arith.constant 0 : i32
    return %c0_i32, %c0_i32_0 : i32, i32
  }
  func.func @transform_9(%arg0: i32, %arg1: memref<16xi32, #tpu.memory_space<smem>>, %arg2: memref<16xi32, #tpu.memory_space<smem>>) -> (i32, i32) {
    %c0_i32 = arith.constant 0 : i32
    %c0_i32_0 = arith.constant 0 : i32
    %c0_i32_1 = arith.constant 0 : i32
    return %c0_i32, %c0_i32_0 : i32, i32
  }
  func.func @transform_10(%arg0: i32, %arg1: memref<16xi32, #tpu.memory_space<smem>>, %arg2: memref<16xi32, #tpu.memory_space<smem>>) -> (i32, i32) {
    %c0_i32 = arith.constant 0 : i32
    %c0_i32_0 = arith.constant 0 : i32
    return %arg0, %c0_i32 : i32, i32
  }
}

</mosaic_0001>

<llo_original>
// kernel: tpu_custom_call.1
$region0: #{tpu_custom_call.1}
  #allocation0 [shape = 'u32[]', space=smem, size = 0x4, offset = 0x4, fixed_abs, tag = 'smem constant byte address 0x4 - core index']
  #allocation1 [shape = 'u32[72,128]{1,0:T(1,128)}', space=vmem, size = 0x9000, scoped, tag = 'internal scratch']
  #allocation2 [shape = 'f32[8,32]{1,0:T(8,128)}', space=vmem, size = 0x1000, scoped, tag = 'scratch operand']
  #allocation3 [shape = 'f32[8,32]{1,0:T(8,128)}', space=vmem, size = 0x1000, scoped, tag = 'scratch operand']
  #allocation4 [shape = 's32[2]{0}', space=sflag, size = 0x8, scoped, tag = 'scratch operand']
  #allocation5 [shape = 's32[1]{0}', space=sflag, size = 0x4, scoped, tag = 'scoped memory for tpu_custom_call.1']
  #allocation6 [shape = 'u8[512]{0}', space=smem, size = 0x200, scoped, tag = 'prefetched SMEM operand 0']
  #allocation7 [shape = 'u8[512]{0}', space=smem, size = 0x200, scoped, tag = 'prefetched SMEM operand 1']
  #allocation8 [shape = 'f32[1,1]{1,0:T(1,128)S(1)}', space=vmem, size = 0x200, scoped, tag = 'scoped memory for tpu_custom_call.1']
  #allocation9 [shape = 's32[]', space=sflag, size = 0x4, offset = 0, fixed_abs, tag = 'sflag constant byte address 0x0 - dummy sync flag']
  #allocation10 [shape = 's32[]', space=sflag, size = 0x4, offset = 0, fixed_abs, tag = 'sflag constant byte address 0x0 - dummy sync flag']
  #allocation11 [shape = 's32[]', space=sflag, size = 0x4, offset = 0, fixed_abs, tag = 'sflag constant byte address 0x0 - dummy sync flag']
  #allocation12 [shape = 's32[]', space=sflag, size = 0x4, offset = 0, fixed_abs, tag = 'sflag constant byte address 0x0 - dummy sync flag']
  #allocation13 [shape = 's32[]', space=sflag, size = 0x4, offset = 0, fixed_abs, tag = 'sflag constant byte address 0x0 - dummy sync flag']
  #allocation14 [shape = 's32[]', space=sflag, size = 0x4, offset = 0, fixed_abs, tag = 'sflag constant byte address 0x0 - dummy sync flag']
  #allocation15 [shape = 's32[]', space=sflag, size = 0x4, offset = 0, fixed_abs, tag = 'sflag constant byte address 0x0 - dummy sync flag']
  #allocation16 [shape = 's32[]', space=sflag, size = 0x4, offset = 0, fixed_abs, tag = 'sflag constant byte address 0x0 - dummy sync flag']
  #allocation17 [shape = 's32[]', space=sflag, size = 0x4, offset = 0, fixed_abs, tag = 'sflag constant byte address 0x0 - dummy sync flag']
  #allocation18 [shape = 's32[]', space=sflag, size = 0x4, offset = 0, fixed_abs, tag = 'sflag constant byte address 0x0 - dummy sync flag']
  #allocation19 [shape = 's32[]', space=sflag, size = 0x4, offset = 0, fixed_abs, tag = 'sflag constant byte address 0x0 - dummy sync flag']
  #allocation20 [shape = 's32[]', space=sflag, size = 0x4, offset = 0, fixed_abs, tag = 'sflag constant byte address 0x0 - dummy sync flag']
  #allocation21 [shape = 's32[]', space=sflag, size = 0x4, offset = 0, fixed_abs, tag = 'sflag constant byte address 0x0 - dummy sync flag']
  #allocation22 [shape = 's32[]', space=sflag, size = 0x4, offset = 0, fixed_abs, tag = 'sflag constant byte address 0x0 - dummy sync flag']
  #allocation23 [shape = 's32[]', space=sflag, size = 0x4, offset = 0, fixed_abs, tag = 'sflag constant byte address 0x0 - dummy sync flag']
  #allocation24 [shape = 's32[]', space=sflag, size = 0x4, offset = 0, fixed_abs, tag = 'sflag constant byte address 0x0 - dummy sync flag']
  %s0 = inlined_call_operand.vmem [shape: s32[16], index: 0, kind: input, shape index: {}]
  %s1 = inlined_call_operand.vmem [shape: s32[16], index: 1, kind: input, shape index: {}]
  %s2 = inlined_call_operand.vmem [shape: f32[11,32], index: 2, kind: input, shape index: {}]
  %s3 = inlined_call_operand.vmem [shape: f32[21,32], index: 3, kind: input, shape index: {}]
  %s4 = inlined_call_operand.vmem [shape: f32[16,128], index: 4, kind: input, shape index: {}]
  %s5 = inlined_call_operand.vmem [shape: f32[16,128], index: 5, kind: input, shape index: {}]
  %s6 = inlined_call_operand.vmem [shape: f32[1,128], index: 6, kind: input, shape index: {}]
  %s7 = inlined_call_operand.vmem [shape: f32[128,16], index: 7, kind: input, shape index: {}]
  %s8 = inlined_call_operand.vmem [shape: f32[1,16], index: 8, kind: input, shape index: {}]
  %s9 = inlined_call_operand.vmem [shape: f32[1,16], index: 9, kind: input, shape index: {}]
  %s10 = inlined_call_operand.vmem [shape: f32[1,16], index: 10, kind: input, shape index: {}]
  %s11 = inlined_call_operand.<no memory space> [shape: f32[1,1], index: 11, kind: input, shape index: {}]
  %s12 = inlined_call_operand.vmem [shape: f32[16,1], index: 12, kind: output, shape index: {}]
  %s13 = sld [smem:[#allocation0]]
  $region545: #{tpu_custom_call.1} parent=0
    _
  %s15 = ssub.s32 1, %s13
  %s16 = scalar_select 0, %s15, %s13
  %s18 = sshll.u32 %s0, 4
  %s19 = int_to_ptr.vmem [resolvable:$true] %s18
  %21 = dma.vmem_to_smem %s19, 16, [#allocation6], [#allocation5]
  %s23 = sshll.u32 %s1, 4
  %s24 = int_to_ptr.vmem [resolvable:$true] %s23
  %26 = dma.vmem_to_smem %s24, 16, [#allocation7], [#allocation5]
  %v27 = vstv %s11
  %28 = vst [vmem:[#allocation8] sm:$0x1] %v27
  %30 = dma.done [#allocation5], 32
  %31 = sfence
  loop: start=0, step=1, limit=4
  $region2: #{tpu_custom_call.1} parent=0 // loop_pre_header
    _
  $region3: #{tpu_custom_call.1} parent=0 // loop_header
    %s33 = sphi 0, %s37
    %p34 = scmp.ge.s32.totalorder %s33, 4
    %s41 = sphi 0, %s41
    %s43 = sphi 0, %s41
    %s44 = sphi 0, %s43
    %s58 = sphi 0, %s44
    %s62 = sphi 0, %s62
    %s64 = sphi 0, %s62
    %s65 = sphi 0, %s64
    %s79 = sphi 0, %s65
    %s83 = sphi 0, %s83
    %s85 = sphi 0, %s83
    %s86 = sphi 0, %s85
    %s100 = sphi 0, %s86
    %s104 = sphi 0, %s104
    %s106 = sphi 0, %s104
    %s107 = sphi 0, %s106
    %s121 = sphi 0, %s107
    %s125 = sphi 0, %s125
    %s127 = sphi 0, %s125
    %s128 = sphi 0, %s127
    %s142 = sphi 0, %s128
    %s146 = sphi 0, %s146
    %s148 = sphi 0, %s146
    %s149 = sphi 0, %s148
    %s163 = sphi 0, %s149
    %s167 = sphi 0, %s167
    %s169 = sphi 0, %s167
    %s170 = sphi 0, %s169
    %s184 = sphi 0, %s170
    %s188 = sphi 0, %s188
    %s190 = sphi 0, %s188
    %s191 = sphi 0, %s190
    %s205 = sphi 0, %s191
    %s211 = sphi 0, %s213
    %s214 = sphi 0, %s211
    %s215 = sphi 0, %s214
    %s231 = sphi 0, %s215
  $region4: #{tpu_custom_call.1} parent=0 // loop_header_branch
    %36 = sbr.rel (%p34) target = $region8
  $region5: #{tpu_custom_call.1} parent=0 // loop_body
    %s38 = ssub.s32 %s33, 1
    %s39 = ssub.s32 %s33, 2
    %s40 = sadd.s32 %s33, 1
    %s42 = sadd.s32 %s41, 1
    %p45 = scmp.eq.s32.totalorder %s33, 1
    %p46 = scmp.ne.s32.totalorder %s41, %s43
    %p47 = scmp.eq.s32.totalorder %s33, 0
    %p48 = por %p46, %p47
    %p49 = scmp.ne.s32.totalorder %s41, %s43
    %p50 = scmp.eq.s32.totalorder %s38, 1
    %p51 = por %p49, %p50
    %p52 = scmp.ne.s32.totalorder %s43, %s44
    %p53 = scmp.eq.s32.totalorder %s38, 0
    %p54 = por %p52, %p53
    %p55 = scmp.ne.s32.totalorder %s43, %s44
    %p56 = scmp.eq.s32.totalorder %s39, 1
    %p57 = por %p55, %p56
    %p59 = scmp.ne.s32.totalorder %s44, %s58
    %p60 = scmp.eq.s32.totalorder %s39, 0
    %p61 = por %p59, %p60
    %s63 = sadd.s32 %s62, 1
    %p66 = scmp.eq.s32.totalorder %s33, 1
    %p67 = scmp.ne.s32.totalorder %s62, %s64
    %p68 = scmp.eq.s32.totalorder %s33, 0
    %p69 = por %p67, %p68
    %p70 = scmp.ne.s32.totalorder %s62, %s64
    %p71 = scmp.eq.s32.totalorder %s38, 1
    %p72 = por %p70, %p71
    %p73 = scmp.ne.s32.totalorder %s64, %s65
    %p74 = scmp.eq.s32.totalorder %s38, 0
    %p75 = por %p73, %p74
    %p76 = scmp.ne.s32.totalorder %s64, %s65
    %p77 = scmp.eq.s32.totalorder %s39, 1
    %p78 = por %p76, %p77
    %p80 = scmp.ne.s32.totalorder %s65, %s79
    %p81 = scmp.eq.s32.totalorder %s39, 0
    %p82 = por %p80, %p81
    %s84 = sadd.s32 %s83, 1
    %p87 = scmp.eq.s32.totalorder %s33, 1
    %p88 = scmp.ne.s32.totalorder %s83, %s85
    %p89 = scmp.eq.s32.totalorder %s33, 0
    %p90 = por %p88, %p89
    %p91 = scmp.ne.s32.totalorder %s83, %s85
    %p92 = scmp.eq.s32.totalorder %s38, 1
    %p93 = por %p91, %p92
    %p94 = scmp.ne.s32.totalorder %s85, %s86
    %p95 = scmp.eq.s32.totalorder %s38, 0
    %p96 = por %p94, %p95
    %p97 = scmp.ne.s32.totalorder %s85, %s86
    %p98 = scmp.eq.s32.totalorder %s39, 1
    %p99 = por %p97, %p98
    %p101 = scmp.ne.s32.totalorder %s86, %s100
    %p102 = scmp.eq.s32.totalorder %s39, 0
    %p103 = por %p101, %p102
    %s105 = sadd.s32 %s104, 1
    %p108 = scmp.eq.s32.totalorder %s33, 1
    %p109 = scmp.ne.s32.totalorder %s104, %s106
    %p110 = scmp.eq.s32.totalorder %s33, 0
    %p111 = por %p109, %p110
    %p112 = scmp.ne.s32.totalorder %s104, %s106
    %p113 = scmp.eq.s32.totalorder %s38, 1
    %p114 = por %p112, %p113
    %p115 = scmp.ne.s32.totalorder %s106, %s107
    %p116 = scmp.eq.s32.totalorder %s38, 0
    %p117 = por %p115, %p116
    %p118 = scmp.ne.s32.totalorder %s106, %s107
    %p119 = scmp.eq.s32.totalorder %s39, 1
    %p120 = por %p118, %p119
    %p122 = scmp.ne.s32.totalorder %s107, %s121
    %p123 = scmp.eq.s32.totalorder %s39, 0
    %p124 = por %p122, %p123
    %s126 = sadd.s32 %s125, 1
    %p129 = scmp.eq.s32.totalorder %s33, 1
    %p130 = scmp.ne.s32.totalorder %s125, %s127
    %p131 = scmp.eq.s32.totalorder %s33, 0
    %p132 = por %p130, %p131
    %p133 = scmp.ne.s32.totalorder %s125, %s127
    %p134 = scmp.eq.s32.totalorder %s38, 1
    %p135 = por %p133, %p134
    %p136 = scmp.ne.s32.totalorder %s127, %s128
    %p137 = scmp.eq.s32.totalorder %s38, 0
    %p138 = por %p136, %p137
    %p139 = scmp.ne.s32.totalorder %s127, %s128
    %p140 = scmp.eq.s32.totalorder %s39, 1
    %p141 = por %p139, %p140
    %p143 = scmp.ne.s32.totalorder %s128, %s142
    %p144 = scmp.eq.s32.totalorder %s39, 0
    %p145 = por %p143, %p144
    %s147 = sadd.s32 %s146, 1
    %p150 = scmp.eq.s32.totalorder %s33, 1
    %p151 = scmp.ne.s32.totalorder %s146, %s148
    %p152 = scmp.eq.s32.totalorder %s33, 0
    %p153 = por %p151, %p152
    %p154 = scmp.ne.s32.totalorder %s146, %s148
    %p155 = scmp.eq.s32.totalorder %s38, 1
    %p156 = por %p154, %p155
    %p157 = scmp.ne.s32.totalorder %s148, %s149
    %p158 = scmp.eq.s32.totalorder %s38, 0
    %p159 = por %p157, %p158
    %p160 = scmp.ne.s32.totalorder %s148, %s149
    %p161 = scmp.eq.s32.totalorder %s39, 1
    %p162 = por %p160, %p161
    %p164 = scmp.ne.s32.totalorder %s149, %s163
    %p165 = scmp.eq.s32.totalorder %s39, 0
    %p166 = por %p164, %p165
    %s168 = sadd.s32 %s167, 1
    %p171 = scmp.eq.s32.totalorder %s33, 1
    %p172 = scmp.ne.s32.totalorder %s167, %s169
    %p173 = scmp.eq.s32.totalorder %s33, 0
    %p174 = por %p172, %p173
    %p175 = scmp.ne.s32.totalorder %s167, %s169
    %p176 = scmp.eq.s32.totalorder %s38, 1
    %p177 = por %p175, %p176
    %p178 = scmp.ne.s32.totalorder %s169, %s170
    %p179 = scmp.eq.s32.totalorder %s38, 0
    %p180 = por %p178, %p179
    %p181 = scmp.ne.s32.totalorder %s169, %s170
    %p182 = scmp.eq.s32.totalorder %s39, 1
    %p183 = por %p181, %p182
    %p185 = scmp.ne.s32.totalorder %s170, %s184
    %p186 = scmp.eq.s32.totalorder %s39, 0
    %p187 = por %p185, %p186
    %s189 = sadd.s32 %s188, 1
    %p192 = scmp.eq.s32.totalorder %s33, 1
    %p193 = scmp.ne.s32.totalorder %s188, %s190
    %p194 = scmp.eq.s32.totalorder %s33, 0
    %p195 = por %p193, %p194
    %p196 = scmp.ne.s32.totalorder %s188, %s190
    %p197 = scmp.eq.s32.totalorder %s38, 1
    %p198 = por %p196, %p197
    %p199 = scmp.ne.s32.totalorder %s190, %s191
    %p200 = scmp.eq.s32.totalorder %s38, 0
    %p201 = por %p199, %p200
    %p202 = scmp.ne.s32.totalorder %s190, %s191
    %p203 = scmp.eq.s32.totalorder %s39, 1
    %p204 = por %p202, %p203
    %p206 = scmp.ne.s32.totalorder %s191, %s205
    %p207 = scmp.eq.s32.totalorder %s39, 0
    %p208 = por %p206, %p207
    %s209 = ssub.s32 %s33, %s40
    %p210 = scmp.eq.s32.totalorder %s209, 0
    %s212 = sadd.s32 %s211, 1
    %s213 = scalar_select %p210, %s211, %s212
    %p216 = pneg %p210
    %p217 = scmp.eq.s32.totalorder %s33, 1
    %p218 = por %p216, %p217
    %p219 = scmp.ne.s32.totalorder %s211, %s214
    %p220 = scmp.eq.s32.totalorder %s33, 0
    %p221 = por %p219, %p220
    %p222 = scmp.ne.s32.totalorder %s211, %s214
    %p223 = scmp.eq.s32.totalorder %s38, 1
    %p224 = por %p222, %p223
    %p225 = scmp.ne.s32.totalorder %s214, %s215
    %p226 = scmp.eq.s32.totalorder %s38, 0
    %p227 = por %p225, %p226
    %p228 = scmp.ne.s32.totalorder %s214, %s215
    %p229 = scmp.eq.s32.totalorder %s39, 1
    %p230 = por %p228, %p229
    %p232 = scmp.ne.s32.totalorder %s215, %s231
    %p233 = scmp.eq.s32.totalorder %s39, 0
    %p234 = por %p232, %p233
    %p235 = scmp.le.s32.totalorder 1, %s33
    %p236 = scmp.lt.s32.totalorder %s33, 3
    %p237 = pnand %p235, %p236
    %p238 = pneg %p237
    // Predicated region
    $region9: #{tpu_custom_call.1} parent=5 // pred_check
      _
    $region10: #{tpu_custom_call.1} parent=5 // pred_check_branch
      %240 = sbr.rel (%p237) target = $region12
    $region11: #{tpu_custom_call.1} parent=5 // pred_region
      %s241 = ssub.s32 %s33, 1
      // Predicated region
      $region13: #{tpu_custom_call.1} parent=11 // pred_check
        %p242 = pneg %p54
      $region14: #{tpu_custom_call.1} parent=11 // pred_check_branch
        %244 = sbr.rel (%p242) target = $region16
      $region15: #{tpu_custom_call.1} parent=11 // pred_region
        _
      $region16: #{tpu_custom_call.1} parent=11 // pred_fallthru
        _
      // Predicated region
      $region17: #{tpu_custom_call.1} parent=11 // pred_check
        %p245 = pneg %p75
      $region18: #{tpu_custom_call.1} parent=11 // pred_check_branch
        %247 = sbr.rel (%p245) target = $region20
      $region19: #{tpu_custom_call.1} parent=11 // pred_region
        _
      $region20: #{tpu_custom_call.1} parent=11 // pred_fallthru
        _
      // Predicated region
      $region21: #{tpu_custom_call.1} parent=11 // pred_check
        %p248 = pneg %p96
      $region22: #{tpu_custom_call.1} parent=11 // pred_check_branch
        %250 = sbr.rel (%p248) target = $region24
      $region23: #{tpu_custom_call.1} parent=11 // pred_region
        _
      $region24: #{tpu_custom_call.1} parent=11 // pred_fallthru
        _
      // Predicated region
      $region25: #{tpu_custom_call.1} parent=11 // pred_check
        %p251 = pneg %p117
      $region26: #{tpu_custom_call.1} parent=11 // pred_check_branch
        %253 = sbr.rel (%p251) target = $region28
      $region27: #{tpu_custom_call.1} parent=11 // pred_region
        _
      $region28: #{tpu_custom_call.1} parent=11 // pred_fallthru
        _
      // Predicated region
      $region29: #{tpu_custom_call.1} parent=11 // pred_check
        %p254 = pneg %p138
      $region30: #{tpu_custom_call.1} parent=11 // pred_check_branch
        %256 = sbr.rel (%p254) target = $region32
      $region31: #{tpu_custom_call.1} parent=11 // pred_region
        _
      $region32: #{tpu_custom_call.1} parent=11 // pred_fallthru
        _
      // Predicated region
      $region33: #{tpu_custom_call.1} parent=11 // pred_check
        %p257 = pneg %p159
      $region34: #{tpu_custom_call.1} parent=11 // pred_check_branch
        %259 = sbr.rel (%p257) target = $region36
      $region35: #{tpu_custom_call.1} parent=11 // pred_region
        _
      $region36: #{tpu_custom_call.1} parent=11 // pred_fallthru
        _
      // Predicated region
      $region37: #{tpu_custom_call.1} parent=11 // pred_check
        %p260 = pneg %p180
      $region38: #{tpu_custom_call.1} parent=11 // pred_check_branch
        %262 = sbr.rel (%p260) target = $region40
      $region39: #{tpu_custom_call.1} parent=11 // pred_region
        _
      $region40: #{tpu_custom_call.1} parent=11 // pred_fallthru
        _
      // Predicated region
      $region41: #{tpu_custom_call.1} parent=11 // pred_check
        %p263 = pneg %p201
      $region42: #{tpu_custom_call.1} parent=11 // pred_check_branch
        %265 = sbr.rel (%p263) target = $region44
      $region43: #{tpu_custom_call.1} parent=11 // pred_region
        _
      $region44: #{tpu_custom_call.1} parent=11 // pred_fallthru
        _
    $region12: #{tpu_custom_call.1} parent=5 // pred_fallthru
      _
    %p266 = scmp.lt.s32.totalorder %s33, 2
    // Predicated region
    $region45: #{tpu_custom_call.1} parent=5 // pred_check
      %p267 = pneg %p266
    $region46: #{tpu_custom_call.1} parent=5 // pred_check_branch
      %269 = sbr.rel (%p267) target = $region48
    $region47: #{tpu_custom_call.1} parent=5 // pred_region
      _
    $region48: #{tpu_custom_call.1} parent=5 // pred_fallthru
      _
    %p270 = scmp.le.s32.totalorder 1, %s33
    %p271 = scmp.lt.s32.totalorder %s33, 3
    %p272 = pnand %p270, %p271
    %p273 = pneg %p272
    // Predicated region
    $region49: #{tpu_custom_call.1} parent=5 // pred_check
      _
    $region50: #{tpu_custom_call.1} parent=5 // pred_check_branch
      %275 = sbr.rel (%p272) target = $region52
    $region51: #{tpu_custom_call.1} parent=5 // pred_region
      %s276 = ssub.s32 %s33, 1
      %p277 = pneg %p54
      %p278 = pneg %p51
      %p279 = pneg %p75
      %p280 = pneg %p72
      %p281 = pneg %p96
      %p282 = pneg %p93
      %p283 = pneg %p117
      %p284 = pneg %p114
      %p285 = pneg %p138
      %p286 = pneg %p135
      %p287 = pneg %p159
      %p288 = pneg %p156
      %p289 = pneg %p180
      %p290 = pneg %p177
      %p291 = pneg %p201
      %p292 = pneg %p198
      %p293 = pneg %p227
      %p294 = pneg %p224
      %p295 = scmp.lt.s32.totalorder %s38, 1
      %s296 = scalar_select %p295, %s38, 1
      %s297 = smul.addr %s296, 8
      %s298 = scalar_lea.vmem %s12, %s297
      %p299 = scmp.lt.s32.totalorder %s38, 1
      %s300 = scalar_select %p299, %s38, 1
      %s301 = smul.addr %s300, 8
      %s302 = scalar_lea.vmem %s12, %s301
      %s303 = smul.u32 %s38, 8
      %s304 = sld [smem:[#allocation6 + %s303]]
      %s305 = sld [smem:[#allocation7 + %s303]]
      %s306 = sadd.s32 %s303, 1
      %s307 = sld [smem:[#allocation6 + %s306]]
      %s308 = sld [smem:[#allocation7 + %s306]]
      %s309 = sadd.s32 %s303, 2
      %s310 = sld [smem:[#allocation6 + %s309]]
      %s311 = sld [smem:[#allocation7 + %s309]]
      %s312 = sadd.s32 %s303, 3
      %s313 = sld [smem:[#allocation6 + %s312]]
      %s314 = sld [smem:[#allocation7 + %s312]]
      %s315 = sadd.s32 %s303, 4
      %s316 = sld [smem:[#allocation6 + %s315]]
      %s317 = sld [smem:[#allocation7 + %s315]]
      %s318 = sadd.s32 %s303, 5
      %s319 = sld [smem:[#allocation6 + %s318]]
      %s320 = sld [smem:[#allocation7 + %s318]]
      %s321 = sadd.s32 %s303, 6
      %s322 = sld [smem:[#allocation6 + %s321]]
      %s323 = sld [smem:[#allocation7 + %s321]]
      %s324 = sadd.s32 %s303, 7
      %s325 = sld [smem:[#allocation6 + %s324]]
      %s326 = sld [smem:[#allocation7 + %s324]]
      %s327 = scalar_lea.vmem %s2, %s304
      // Predicated region
      $region53: #{tpu_custom_call.1} parent=51 // pred_check
        _
      $region54: #{tpu_custom_call.1} parent=51 // pred_check_branch
        %329 = sbr.rel target = $region56
      $region55: #{tpu_custom_call.1} parent=51 // pred_region
        // Predicated region
        $region68: #{tpu_custom_call.1} parent=55 // pred_check
          _
        $region69: #{tpu_custom_call.1} parent=55 // pred_check_branch
          %345 = sbr.rel (0) target = $region71
        $region70: #{tpu_custom_call.1} parent=55 // pred_region
          %s347 = ssub.s32 2, 1
          loop: start=0, step=1, limit=1
          $region72: #{tpu_custom_call.1} parent=70 // loop_pre_header
            _
          $region73: #{tpu_custom_call.1} parent=70 // loop_header
            %s349 = sphi 0, %s353
            %p350 = scmp.ge.s32.totalorder %s349, 1
            %s354 = sphi %s327, %s327
            %s355 = sphi [#allocation2], [#allocation2]
          $region74: #{tpu_custom_call.1} parent=70 // loop_header_branch
            %352 = sbr.rel (%p350) target = $region78
          $region75: #{tpu_custom_call.1} parent=70 // loop_body
            %v356 = vld [vmem:[%s354] sm:%s347]
            %357 = vst [vmem:[%s355] sm:%s347] %v356
          $region76: #{tpu_custom_call.1} parent=70 // loop_footer
            %s353 = sadd.s32 1, %s349
          $region77: #{tpu_custom_call.1} parent=70 // loop_footer_branch
            %348 = sbr.rel target = $region73
          $region78: #{tpu_custom_call.1} parent=70 // loop_exit
            _
        $region71: #{tpu_custom_call.1} parent=55 // pred_fallthru
          _
      $region56: #{tpu_custom_call.1} parent=51 // pred_fallthru
        _
      // Predicated region
      $region57: #{tpu_custom_call.1} parent=51 // pred_check
        _
      $region58: #{tpu_custom_call.1} parent=51 // pred_check_branch
        %331 = sbr.rel (0) target = $region60
      $region59: #{tpu_custom_call.1} parent=51 // pred_region
        %s333 = ssub.s32 2, 1
        loop: start=0, step=1, limit=1
        $region61: #{tpu_custom_call.1} parent=59 // loop_pre_header
          _
        $region62: #{tpu_custom_call.1} parent=59 // loop_header
          %s335 = sphi 0, %s339
          %p336 = scmp.ge.s32.totalorder %s335, 1
          %s340 = sphi %s327, %s327
          %s341 = sphi [#allocation2], [#allocation2]
        $region63: #{tpu_custom_call.1} parent=59 // loop_header_branch
          %338 = sbr.rel (%p336) target = $region67
        $region64: #{tpu_custom_call.1} parent=59 // loop_body
          %v342 = vld [vmem:[%s340] sm:%s333]
          %343 = vst [vmem:[%s341] sm:%s333] %v342
        $region65: #{tpu_custom_call.1} parent=59 // loop_footer
          %s339 = sadd.s32 1, %s335
        $region66: #{tpu_custom_call.1} parent=59 // loop_footer_branch
          %334 = sbr.rel target = $region62
        $region67: #{tpu_custom_call.1} parent=59 // loop_exit
          _
      $region60: #{tpu_custom_call.1} parent=51 // pred_fallthru
        _
      // Predicated region
      $region79: #{tpu_custom_call.1} parent=51 // pred_check
        _
      $region80: #{tpu_custom_call.1} parent=51 // pred_check_branch
        %360 = sbr.rel (0) target = $region82
      $region81: #{tpu_custom_call.1} parent=51 // pred_region
        %361 = vsyncadd [#allocation4], 16
      $region82: #{tpu_custom_call.1} parent=51 // pred_fallthru
        _
      %s362 = scalar_lea.vmem %s3, %s305
      %s363 = scalar_lea.sflag [#allocation4], 1
      // Predicated region
      $region83: #{tpu_custom_call.1} parent=51 // pred_check
        _
      $region84: #{tpu_custom_call.1} parent=51 // pred_check_branch
        %365 = sbr.rel target = $region86
      $region85: #{tpu_custom_call.1} parent=51 // pred_region
        // Predicated region
        $region98: #{tpu_custom_call.1} parent=85 // pred_check
          _
        $region99: #{tpu_custom_call.1} parent=85 // pred_check_branch
          %381 = sbr.rel (0) target = $region101
        $region100: #{tpu_custom_call.1} parent=85 // pred_region
          %s383 = ssub.s32 2, 1
          loop: start=0, step=1, limit=1
          $region102: #{tpu_custom_call.1} parent=100 // loop_pre_header
            _
          $region103: #{tpu_custom_call.1} parent=100 // loop_header
            %s385 = sphi 0, %s389
            %p386 = scmp.ge.s32.totalorder %s385, 1
            %s390 = sphi %s362, %s362
            %s391 = sphi [#allocation3], [#allocation3]
          $region104: #{tpu_custom_call.1} parent=100 // loop_header_branch
            %388 = sbr.rel (%p386) target = $region108
          $region105: #{tpu_custom_call.1} parent=100 // loop_body
            %v392 = vld [vmem:[%s390] sm:%s383]
            %393 = vst [vmem:[%s391] sm:%s383] %v392
          $region106: #{tpu_custom_call.1} parent=100 // loop_footer
            %s389 = sadd.s32 1, %s385
          $region107: #{tpu_custom_call.1} parent=100 // loop_footer_branch
            %384 = sbr.rel target = $region103
          $region108: #{tpu_custom_call.1} parent=100 // loop_exit
            _
        $region101: #{tpu_custom_call.1} parent=85 // pred_fallthru
          _
      $region86: #{tpu_custom_call.1} parent=51 // pred_fallthru
        _
      // Predicated region
      $region87: #{tpu_custom_call.1} parent=51 // pred_check
        _
      $region88: #{tpu_custom_call.1} parent=51 // pred_check_branch
        %367 = sbr.rel (0) target = $region90
      $region89: #{tpu_custom_call.1} parent=51 // pred_region
        %s369 = ssub.s32 2, 1
        loop: start=0, step=1, limit=1
        $region91: #{tpu_custom_call.1} parent=89 // loop_pre_header
          _
        $region92: #{tpu_custom_call.1} parent=89 // loop_header
          %s371 = sphi 0, %s375
          %p372 = scmp.ge.s32.totalorder %s371, 1
          %s376 = sphi %s362, %s362
          %s377 = sphi [#allocation3], [#allocation3]
        $region93: #{tpu_custom_call.1} parent=89 // loop_header_branch
          %374 = sbr.rel (%p372) target = $region97
        $region94: #{tpu_custom_call.1} parent=89 // loop_body
          %v378 = vld [vmem:[%s376] sm:%s369]
          %379 = vst [vmem:[%s377] sm:%s369] %v378
        $region95: #{tpu_custom_call.1} parent=89 // loop_footer
          %s375 = sadd.s32 1, %s371
        $region96: #{tpu_custom_call.1} parent=89 // loop_footer_branch
          %370 = sbr.rel target = $region92
        $region97: #{tpu_custom_call.1} parent=89 // loop_exit
          _
      $region90: #{tpu_custom_call.1} parent=51 // pred_fallthru
        _
      // Predicated region
      $region109: #{tpu_custom_call.1} parent=51 // pred_check
        _
      $region110: #{tpu_custom_call.1} parent=51 // pred_check_branch
        %396 = sbr.rel (0) target = $region112
      $region111: #{tpu_custom_call.1} parent=51 // pred_region
        %397 = vsyncadd %s363, 16
      $region112: #{tpu_custom_call.1} parent=51 // pred_fallthru
        _
      %s398 = scalar_lea.vmem %s2, %s307
      %s399 = scalar_lea.vmem [#allocation2], 1
      // Predicated region
      $region113: #{tpu_custom_call.1} parent=51 // pred_check
        _
      $region114: #{tpu_custom_call.1} parent=51 // pred_check_branch
        %401 = sbr.rel target = $region116
      $region115: #{tpu_custom_call.1} parent=51 // pred_region
        // Predicated region
        $region128: #{tpu_custom_call.1} parent=115 // pred_check
          _
        $region129: #{tpu_custom_call.1} parent=115 // pred_check_branch
          %417 = sbr.rel (0) target = $region131
        $region130: #{tpu_custom_call.1} parent=115 // pred_region
          %s419 = ssub.s32 2, 1
          loop: start=0, step=1, limit=1
          $region132: #{tpu_custom_call.1} parent=130 // loop_pre_header
            _
          $region133: #{tpu_custom_call.1} parent=130 // loop_header
            %s421 = sphi 0, %s425
            %p422 = scmp.ge.s32.totalorder %s421, 1
            %s426 = sphi %s398, %s398
            %s427 = sphi %s399, %s399
          $region134: #{tpu_custom_call.1} parent=130 // loop_header_branch
            %424 = sbr.rel (%p422) target = $region138
          $region135: #{tpu_custom_call.1} parent=130 // loop_body
            %v428 = vld [vmem:[%s426] sm:%s419]
            %429 = vst [vmem:[%s427] sm:%s419] %v428
          $region136: #{tpu_custom_call.1} parent=130 // loop_footer
            %s425 = sadd.s32 1, %s421
          $region137: #{tpu_custom_call.1} parent=130 // loop_footer_branch
            %420 = sbr.rel target = $region133
          $region138: #{tpu_custom_call.1} parent=130 // loop_exit
            _
        $region131: #{tpu_custom_call.1} parent=115 // pred_fallthru
          _
      $region116: #{tpu_custom_call.1} parent=51 // pred_fallthru
        _
      // Predicated region
      $region117: #{tpu_custom_call.1} parent=51 // pred_check
        _
      $region118: #{tpu_custom_call.1} parent=51 // pred_check_branch
        %403 = sbr.rel (0) target = $region120
      $region119: #{tpu_custom_call.1} parent=51 // pred_region
        %s405 = ssub.s32 2, 1
        loop: start=0, step=1, limit=1
        $region121: #{tpu_custom_call.1} parent=119 // loop_pre_header
          _
        $region122: #{tpu_custom_call.1} parent=119 // loop_header
          %s407 = sphi 0, %s411
          %p408 = scmp.ge.s32.totalorder %s407, 1
          %s412 = sphi %s398, %s398
          %s413 = sphi %s399, %s399
        $region123: #{tpu_custom_call.1} parent=119 // loop_header_branch
          %410 = sbr.rel (%p408) target = $region127
        $region124: #{tpu_custom_call.1} parent=119 // loop_body
          %v414 = vld [vmem:[%s412] sm:%s405]
          %415 = vst [vmem:[%s413] sm:%s405] %v414
        $region125: #{tpu_custom_call.1} parent=119 // loop_footer
          %s411 = sadd.s32 1, %s407
        $region126: #{tpu_custom_call.1} parent=119 // loop_footer_branch
          %406 = sbr.rel target = $region122
        $region127: #{tpu_custom_call.1} parent=119 // loop_exit
          _
      $region120: #{tpu_custom_call.1} parent=51 // pred_fallthru
        _
      // Predicated region
      $region139: #{tpu_custom_call.1} parent=51 // pred_check
        _
      $region140: #{tpu_custom_call.1} parent=51 // pred_check_branch
        %432 = sbr.rel (0) target = $region142
      $region141: #{tpu_custom_call.1} parent=51 // pred_region
        %433 = vsyncadd [#allocation4], 16
      $region142: #{tpu_custom_call.1} parent=51 // pred_fallthru
        _
      %s434 = scalar_lea.vmem %s3, %s308
      %s435 = scalar_lea.vmem [#allocation3], 1
      // Predicated region
      $region143: #{tpu_custom_call.1} parent=51 // pred_check
        _
      $region144: #{tpu_custom_call.1} parent=51 // pred_check_branch
        %437 = sbr.rel target = $region146
      $region145: #{tpu_custom_call.1} parent=51 // pred_region
        // Predicated region
        $region158: #{tpu_custom_call.1} parent=145 // pred_check
          _
        $region159: #{tpu_custom_call.1} parent=145 // pred_check_branch
          %453 = sbr.rel (0) target = $region161
        $region160: #{tpu_custom_call.1} parent=145 // pred_region
          %s455 = ssub.s32 2, 1
          loop: start=0, step=1, limit=1
          $region162: #{tpu_custom_call.1} parent=160 // loop_pre_header
            _
          $region163: #{tpu_custom_call.1} parent=160 // loop_header
            %s457 = sphi 0, %s461
            %p458 = scmp.ge.s32.totalorder %s457, 1
            %s462 = sphi %s434, %s434
            %s463 = sphi %s435, %s435
          $region164: #{tpu_custom_call.1} parent=160 // loop_header_branch
            %460 = sbr.rel (%p458) target = $region168
          $region165: #{tpu_custom_call.1} parent=160 // loop_body
            %v464 = vld [vmem:[%s462] sm:%s455]
            %465 = vst [vmem:[%s463] sm:%s455] %v464
          $region166: #{tpu_custom_call.1} parent=160 // loop_footer
            %s461 = sadd.s32 1, %s457
          $region167: #{tpu_custom_call.1} parent=160 // loop_footer_branch
            %456 = sbr.rel target = $region163
          $region168: #{tpu_custom_call.1} parent=160 // loop_exit
            _
        $region161: #{tpu_custom_call.1} parent=145 // pred_fallthru
          _
      $region146: #{tpu_custom_call.1} parent=51 // pred_fallthru
        _
      // Predicated region
      $region147: #{tpu_custom_call.1} parent=51 // pred_check
        _
      $region148: #{tpu_custom_call.1} parent=51 // pred_check_branch
        %439 = sbr.rel (0) target = $region150
      $region149: #{tpu_custom_call.1} parent=51 // pred_region
        %s441 = ssub.s32 2, 1
        loop: start=0, step=1, limit=1
        $region151: #{tpu_custom_call.1} parent=149 // loop_pre_header
          _
        $region152: #{tpu_custom_call.1} parent=149 // loop_header
          %s443 = sphi 0, %s447
          %p444 = scmp.ge.s32.totalorder %s443, 1
          %s448 = sphi %s434, %s434
          %s449 = sphi %s435, %s435
        $region153: #{tpu_custom_call.1} parent=149 // loop_header_branch
          %446 = sbr.rel (%p444) target = $region157
        $region154: #{tpu_custom_call.1} parent=149 // loop_body
          %v450 = vld [vmem:[%s448] sm:%s441]
          %451 = vst [vmem:[%s449] sm:%s441] %v450
        $region155: #{tpu_custom_call.1} parent=149 // loop_footer
          %s447 = sadd.s32 1, %s443
        $region156: #{tpu_custom_call.1} parent=149 // loop_footer_branch
          %442 = sbr.rel target = $region152
        $region157: #{tpu_custom_call.1} parent=149 // loop_exit
          _
      $region150: #{tpu_custom_call.1} parent=51 // pred_fallthru
        _
      // Predicated region
      $region169: #{tpu_custom_call.1} parent=51 // pred_check
        _
      $region170: #{tpu_custom_call.1} parent=51 // pred_check_branch
        %468 = sbr.rel (0) target = $region172
      $region171: #{tpu_custom_call.1} parent=51 // pred_region
        %469 = vsyncadd %s363, 16
      $region172: #{tpu_custom_call.1} parent=51 // pred_fallthru
        _
      %s470 = scalar_lea.vmem %s2, %s310
      %s471 = scalar_lea.vmem [#allocation2], 2
      // Predicated region
      $region173: #{tpu_custom_call.1} parent=51 // pred_check
        _
      $region174: #{tpu_custom_call.1} parent=51 // pred_check_branch
        %473 = sbr.rel target = $region176
      $region175: #{tpu_custom_call.1} parent=51 // pred_region
        // Predicated region
        $region188: #{tpu_custom_call.1} parent=175 // pred_check
          _
        $region189: #{tpu_custom_call.1} parent=175 // pred_check_branch
          %489 = sbr.rel (0) target = $region191
        $region190: #{tpu_custom_call.1} parent=175 // pred_region
          %s491 = ssub.s32 2, 1
          loop: start=0, step=1, limit=1
          $region192: #{tpu_custom_call.1} parent=190 // loop_pre_header
            _
          $region193: #{tpu_custom_call.1} parent=190 // loop_header
            %s493 = sphi 0, %s497
            %p494 = scmp.ge.s32.totalorder %s493, 1
            %s498 = sphi %s470, %s470
            %s499 = sphi %s471, %s471
          $region194: #{tpu_custom_call.1} parent=190 // loop_header_branch
            %496 = sbr.rel (%p494) target = $region198
          $region195: #{tpu_custom_call.1} parent=190 // loop_body
            %v500 = vld [vmem:[%s498] sm:%s491]
            %501 = vst [vmem:[%s499] sm:%s491] %v500
          $region196: #{tpu_custom_call.1} parent=190 // loop_footer
            %s497 = sadd.s32 1, %s493
          $region197: #{tpu_custom_call.1} parent=190 // loop_footer_branch
            %492 = sbr.rel target = $region193
          $region198: #{tpu_custom_call.1} parent=190 // loop_exit
            _
        $region191: #{tpu_custom_call.1} parent=175 // pred_fallthru
          _
      $region176: #{tpu_custom_call.1} parent=51 // pred_fallthru
        _
      // Predicated region
      $region177: #{tpu_custom_call.1} parent=51 // pred_check
        _
      $region178: #{tpu_custom_call.1} parent=51 // pred_check_branch
        %475 = sbr.rel (0) target = $region180
      $region179: #{tpu_custom_call.1} parent=51 // pred_region
        %s477 = ssub.s32 2, 1
        loop: start=0, step=1, limit=1
        $region181: #{tpu_custom_call.1} parent=179 // loop_pre_header
          _
        $region182: #{tpu_custom_call.1} parent=179 // loop_header
          %s479 = sphi 0, %s483
          %p480 = scmp.ge.s32.totalorder %s479, 1
          %s484 = sphi %s470, %s470
          %s485 = sphi %s471, %s471
        $region183: #{tpu_custom_call.1} parent=179 // loop_header_branch
          %482 = sbr.rel (%p480) target = $region187
        $region184: #{tpu_custom_call.1} parent=179 // loop_body
          %v486 = vld [vmem:[%s484] sm:%s477]
          %487 = vst [vmem:[%s485] sm:%s477] %v486
        $region185: #{tpu_custom_call.1} parent=179 // loop_footer
          %s483 = sadd.s32 1, %s479
        $region186: #{tpu_custom_call.1} parent=179 // loop_footer_branch
          %478 = sbr.rel target = $region182
        $region187: #{tpu_custom_call.1} parent=179 // loop_exit
          _
      $region180: #{tpu_custom_call.1} parent=51 // pred_fallthru
        _
      // Predicated region
      $region199: #{tpu_custom_call.1} parent=51 // pred_check
        _
      $region200: #{tpu_custom_call.1} parent=51 // pred_check_branch
        %504 = sbr.rel (0) target = $region202
      $region201: #{tpu_custom_call.1} parent=51 // pred_region
        %505 = vsyncadd [#allocation4], 16
      $region202: #{tpu_custom_call.1} parent=51 // pred_fallthru
        _
      %s506 = scalar_lea.vmem %s3, %s311
      %s507 = scalar_lea.vmem [#allocation3], 2
      // Predicated region
      $region203: #{tpu_custom_call.1} parent=51 // pred_check
        _
      $region204: #{tpu_custom_call.1} parent=51 // pred_check_branch
        %509 = sbr.rel target = $region206
      $region205: #{tpu_custom_call.1} parent=51 // pred_region
        // Predicated region
        $region218: #{tpu_custom_call.1} parent=205 // pred_check
          _
        $region219: #{tpu_custom_call.1} parent=205 // pred_check_branch
          %525 = sbr.rel (0) target = $region221
        $region220: #{tpu_custom_call.1} parent=205 // pred_region
          %s527 = ssub.s32 2, 1
          loop: start=0, step=1, limit=1
          $region222: #{tpu_custom_call.1} parent=220 // loop_pre_header
            _
          $region223: #{tpu_custom_call.1} parent=220 // loop_header
            %s529 = sphi 0, %s533
            %p530 = scmp.ge.s32.totalorder %s529, 1
            %s534 = sphi %s506, %s506
            %s535 = sphi %s507, %s507
          $region224: #{tpu_custom_call.1} parent=220 // loop_header_branch
            %532 = sbr.rel (%p530) target = $region228
          $region225: #{tpu_custom_call.1} parent=220 // loop_body
            %v536 = vld [vmem:[%s534] sm:%s527]
            %537 = vst [vmem:[%s535] sm:%s527] %v536
          $region226: #{tpu_custom_call.1} parent=220 // loop_footer
            %s533 = sadd.s32 1, %s529
          $region227: #{tpu_custom_call.1} parent=220 // loop_footer_branch
            %528 = sbr.rel target = $region223
          $region228: #{tpu_custom_call.1} parent=220 // loop_exit
            _
        $region221: #{tpu_custom_call.1} parent=205 // pred_fallthru
          _
      $region206: #{tpu_custom_call.1} parent=51 // pred_fallthru
        _
      // Predicated region
      $region207: #{tpu_custom_call.1} parent=51 // pred_check
        _
      $region208: #{tpu_custom_call.1} parent=51 // pred_check_branch
        %511 = sbr.rel (0) target = $region210
      $region209: #{tpu_custom_call.1} parent=51 // pred_region
        %s513 = ssub.s32 2, 1
        loop: start=0, step=1, limit=1
        $region211: #{tpu_custom_call.1} parent=209 // loop_pre_header
          _
        $region212: #{tpu_custom_call.1} parent=209 // loop_header
          %s515 = sphi 0, %s519
          %p516 = scmp.ge.s32.totalorder %s515, 1
          %s520 = sphi %s506, %s506
          %s521 = sphi %s507, %s507
        $region213: #{tpu_custom_call.1} parent=209 // loop_header_branch
          %518 = sbr.rel (%p516) target = $region217
        $region214: #{tpu_custom_call.1} parent=209 // loop_body
          %v522 = vld [vmem:[%s520] sm:%s513]
          %523 = vst [vmem:[%s521] sm:%s513] %v522
        $region215: #{tpu_custom_call.1} parent=209 // loop_footer
          %s519 = sadd.s32 1, %s515
        $region216: #{tpu_custom_call.1} parent=209 // loop_footer_branch
          %514 = sbr.rel target = $region212
        $region217: #{tpu_custom_call.1} parent=209 // loop_exit
          _
      $region210: #{tpu_custom_call.1} parent=51 // pred_fallthru
        _
      // Predicated region
      $region229: #{tpu_custom_call.1} parent=51 // pred_check
        _
      $region230: #{tpu_custom_call.1} parent=51 // pred_check_branch
        %540 = sbr.rel (0) target = $region232
      $region231: #{tpu_custom_call.1} parent=51 // pred_region
        %541 = vsyncadd %s363, 16
      $region232: #{tpu_custom_call.1} parent=51 // pred_fallthru
        _
      %s542 = scalar_lea.vmem %s2, %s313
      %s543 = scalar_lea.vmem [#allocation2], 3
      // Predicated region
      $region233: #{tpu_custom_call.1} parent=51 // pred_check
        _
      $region234: #{tpu_custom_call.1} parent=51 // pred_check_branch
        %545 = sbr.rel target = $region236
      $region235: #{tpu_custom_call.1} parent=51 // pred_region
        // Predicated region
        $region248: #{tpu_custom_call.1} parent=235 // pred_check
          _
        $region249: #{tpu_custom_call.1} parent=235 // pred_check_branch
          %561 = sbr.rel (0) target = $region251
        $region250: #{tpu_custom_call.1} parent=235 // pred_region
          %s563 = ssub.s32 2, 1
          loop: start=0, step=1, limit=1
          $region252: #{tpu_custom_call.1} parent=250 // loop_pre_header
            _
          $region253: #{tpu_custom_call.1} parent=250 // loop_header
            %s565 = sphi 0, %s569
            %p566 = scmp.ge.s32.totalorder %s565, 1
            %s570 = sphi %s542, %s542
            %s571 = sphi %s543, %s543
          $region254: #{tpu_custom_call.1} parent=250 // loop_header_branch
            %568 = sbr.rel (%p566) target = $region258
          $region255: #{tpu_custom_call.1} parent=250 // loop_body
            %v572 = vld [vmem:[%s570] sm:%s563]
            %573 = vst [vmem:[%s571] sm:%s563] %v572
          $region256: #{tpu_custom_call.1} parent=250 // loop_footer
            %s569 = sadd.s32 1, %s565
          $region257: #{tpu_custom_call.1} parent=250 // loop_footer_branch
            %564 = sbr.rel target = $region253
          $region258: #{tpu_custom_call.1} parent=250 // loop_exit
            _
        $region251: #{tpu_custom_call.1} parent=235 // pred_fallthru
          _
      $region236: #{tpu_custom_call.1} parent=51 // pred_fallthru
        _
      // Predicated region
      $region237: #{tpu_custom_call.1} parent=51 // pred_check
        _
      $region238: #{tpu_custom_call.1} parent=51 // pred_check_branch
        %547 = sbr.rel (0) target = $region240
      $region239: #{tpu_custom_call.1} parent=51 // pred_region
        %s549 = ssub.s32 2, 1
        loop: start=0, step=1, limit=1
        $region241: #{tpu_custom_call.1} parent=239 // loop_pre_header
          _
        $region242: #{tpu_custom_call.1} parent=239 // loop_header
          %s551 = sphi 0, %s555
          %p552 = scmp.ge.s32.totalorder %s551, 1
          %s556 = sphi %s542, %s542
          %s557 = sphi %s543, %s543
        $region243: #{tpu_custom_call.1} parent=239 // loop_header_branch
          %554 = sbr.rel (%p552) target = $region247
        $region244: #{tpu_custom_call.1} parent=239 // loop_body
          %v558 = vld [vmem:[%s556] sm:%s549]
          %559 = vst [vmem:[%s557] sm:%s549] %v558
        $region245: #{tpu_custom_call.1} parent=239 // loop_footer
          %s555 = sadd.s32 1, %s551
        $region246: #{tpu_custom_call.1} parent=239 // loop_footer_branch
          %550 = sbr.rel target = $region242
        $region247: #{tpu_custom_call.1} parent=239 // loop_exit
          _
      $region240: #{tpu_custom_call.1} parent=51 // pred_fallthru
        _
      // Predicated region
      $region259: #{tpu_custom_call.1} parent=51 // pred_check
        _
      $region260: #{tpu_custom_call.1} parent=51 // pred_check_branch
        %576 = sbr.rel (0) target = $region262
      $region261: #{tpu_custom_call.1} parent=51 // pred_region
        %577 = vsyncadd [#allocation4], 16
      $region262: #{tpu_custom_call.1} parent=51 // pred_fallthru
        _
      %s578 = scalar_lea.vmem %s3, %s314
      %s579 = scalar_lea.vmem [#allocation3], 3
      // Predicated region
      $region263: #{tpu_custom_call.1} parent=51 // pred_check
        _
      $region264: #{tpu_custom_call.1} parent=51 // pred_check_branch
        %581 = sbr.rel target = $region266
      $region265: #{tpu_custom_call.1} parent=51 // pred_region
        // Predicated region
        $region278: #{tpu_custom_call.1} parent=265 // pred_check
          _
        $region279: #{tpu_custom_call.1} parent=265 // pred_check_branch
          %597 = sbr.rel (0) target = $region281
        $region280: #{tpu_custom_call.1} parent=265 // pred_region
          %s599 = ssub.s32 2, 1
          loop: start=0, step=1, limit=1
          $region282: #{tpu_custom_call.1} parent=280 // loop_pre_header
            _
          $region283: #{tpu_custom_call.1} parent=280 // loop_header
            %s601 = sphi 0, %s605
            %p602 = scmp.ge.s32.totalorder %s601, 1
            %s606 = sphi %s578, %s578
            %s607 = sphi %s579, %s579
          $region284: #{tpu_custom_call.1} parent=280 // loop_header_branch
            %604 = sbr.rel (%p602) target = $region288
          $region285: #{tpu_custom_call.1} parent=280 // loop_body
            %v608 = vld [vmem:[%s606] sm:%s599]
            %609 = vst [vmem:[%s607] sm:%s599] %v608
          $region286: #{tpu_custom_call.1} parent=280 // loop_footer
            %s605 = sadd.s32 1, %s601
          $region287: #{tpu_custom_call.1} parent=280 // loop_footer_branch
            %600 = sbr.rel target = $region283
          $region288: #{tpu_custom_call.1} parent=280 // loop_exit
            _
        $region281: #{tpu_custom_call.1} parent=265 // pred_fallthru
          _
      $region266: #{tpu_custom_call.1} parent=51 // pred_fallthru
        _
      // Predicated region
      $region267: #{tpu_custom_call.1} parent=51 // pred_check
        _
      $region268: #{tpu_custom_call.1} parent=51 // pred_check_branch
        %583 = sbr.rel (0) target = $region270
      $region269: #{tpu_custom_call.1} parent=51 // pred_region
        %s585 = ssub.s32 2, 1
        loop: start=0, step=1, limit=1
        $region271: #{tpu_custom_call.1} parent=269 // loop_pre_header
          _
        $region272: #{tpu_custom_call.1} parent=269 // loop_header
          %s587 = sphi 0, %s591
          %p588 = scmp.ge.s32.totalorder %s587, 1
          %s592 = sphi %s578, %s578
          %s593 = sphi %s579, %s579
        $region273: #{tpu_custom_call.1} parent=269 // loop_header_branch
          %590 = sbr.rel (%p588) target = $region277
        $region274: #{tpu_custom_call.1} parent=269 // loop_body
          %v594 = vld [vmem:[%s592] sm:%s585]
          %595 = vst [vmem:[%s593] sm:%s585] %v594
        $region275: #{tpu_custom_call.1} parent=269 // loop_footer
          %s591 = sadd.s32 1, %s587
        $region276: #{tpu_custom_call.1} parent=269 // loop_footer_branch
          %586 = sbr.rel target = $region272
        $region277: #{tpu_custom_call.1} parent=269 // loop_exit
          _
      $region270: #{tpu_custom_call.1} parent=51 // pred_fallthru
        _
      // Predicated region
      $region289: #{tpu_custom_call.1} parent=51 // pred_check
        _
      $region290: #{tpu_custom_call.1} parent=51 // pred_check_branch
        %612 = sbr.rel (0) target = $region292
      $region291: #{tpu_custom_call.1} parent=51 // pred_region
        %613 = vsyncadd %s363, 16
      $region292: #{tpu_custom_call.1} parent=51 // pred_fallthru
        _
      %s614 = scalar_lea.vmem %s2, %s316
      %s615 = scalar_lea.vmem [#allocation2], 4
      // Predicated region
      $region293: #{tpu_custom_call.1} parent=51 // pred_check
        _
      $region294: #{tpu_custom_call.1} parent=51 // pred_check_branch
        %617 = sbr.rel target = $region296
      $region295: #{tpu_custom_call.1} parent=51 // pred_region
        // Predicated region
        $region308: #{tpu_custom_call.1} parent=295 // pred_check
          _
        $region309: #{tpu_custom_call.1} parent=295 // pred_check_branch
          %633 = sbr.rel (0) target = $region311
        $region310: #{tpu_custom_call.1} parent=295 // pred_region
          %s635 = ssub.s32 2, 1
          loop: start=0, step=1, limit=1
          $region312: #{tpu_custom_call.1} parent=310 // loop_pre_header
            _
          $region313: #{tpu_custom_call.1} parent=310 // loop_header
            %s637 = sphi 0, %s641
            %p638 = scmp.ge.s32.totalorder %s637, 1
            %s642 = sphi %s614, %s614
            %s643 = sphi %s615, %s615
          $region314: #{tpu_custom_call.1} parent=310 // loop_header_branch
            %640 = sbr.rel (%p638) target = $region318
          $region315: #{tpu_custom_call.1} parent=310 // loop_body
            %v644 = vld [vmem:[%s642] sm:%s635]
            %645 = vst [vmem:[%s643] sm:%s635] %v644
          $region316: #{tpu_custom_call.1} parent=310 // loop_footer
            %s641 = sadd.s32 1, %s637
          $region317: #{tpu_custom_call.1} parent=310 // loop_footer_branch
            %636 = sbr.rel target = $region313
          $region318: #{tpu_custom_call.1} parent=310 // loop_exit
            _
        $region311: #{tpu_custom_call.1} parent=295 // pred_fallthru
          _
      $region296: #{tpu_custom_call.1} parent=51 // pred_fallthru
        _
      // Predicated region
      $region297: #{tpu_custom_call.1} parent=51 // pred_check
        _
      $region298: #{tpu_custom_call.1} parent=51 // pred_check_branch
        %619 = sbr.rel (0) target = $region300
      $region299: #{tpu_custom_call.1} parent=51 // pred_region
        %s621 = ssub.s32 2, 1
        loop: start=0, step=1, limit=1
        $region301: #{tpu_custom_call.1} parent=299 // loop_pre_header
          _
        $region302: #{tpu_custom_call.1} parent=299 // loop_header
          %s623 = sphi 0, %s627
          %p624 = scmp.ge.s32.totalorder %s623, 1
          %s628 = sphi %s614, %s614
          %s629 = sphi %s615, %s615
        $region303: #{tpu_custom_call.1} parent=299 // loop_header_branch
          %626 = sbr.rel (%p624) target = $region307
        $region304: #{tpu_custom_call.1} parent=299 // loop_body
          %v630 = vld [vmem:[%s628] sm:%s621]
          %631 = vst [vmem:[%s629] sm:%s621] %v630
        $region305: #{tpu_custom_call.1} parent=299 // loop_footer
          %s627 = sadd.s32 1, %s623
        $region306: #{tpu_custom_call.1} parent=299 // loop_footer_branch
          %622 = sbr.rel target = $region302
        $region307: #{tpu_custom_call.1} parent=299 // loop_exit
          _
      $region300: #{tpu_custom_call.1} parent=51 // pred_fallthru
        _
      // Predicated region
      $region319: #{tpu_custom_call.1} parent=51 // pred_check
        _
      $region320: #{tpu_custom_call.1} parent=51 // pred_check_branch
        %648 = sbr.rel (0) target = $region322
      $region321: #{tpu_custom_call.1} parent=51 // pred_region
        %649 = vsyncadd [#allocation4], 16
      $region322: #{tpu_custom_call.1} parent=51 // pred_fallthru
        _
      %s650 = scalar_lea.vmem %s3, %s317
      %s651 = scalar_lea.vmem [#allocation3], 4
      // Predicated region
      $region323: #{tpu_custom_call.1} parent=51 // pred_check
        _
      $region324: #{tpu_custom_call.1} parent=51 // pred_check_branch
        %653 = sbr.rel target = $region326
      $region325: #{tpu_custom_call.1} parent=51 // pred_region
        // Predicated region
        $region338: #{tpu_custom_call.1} parent=325 // pred_check
          _
        $region339: #{tpu_custom_call.1} parent=325 // pred_check_branch
          %669 = sbr.rel (0) target = $region341
        $region340: #{tpu_custom_call.1} parent=325 // pred_region
          %s671 = ssub.s32 2, 1
          loop: start=0, step=1, limit=1
          $region342: #{tpu_custom_call.1} parent=340 // loop_pre_header
            _
          $region343: #{tpu_custom_call.1} parent=340 // loop_header
            %s673 = sphi 0, %s677
            %p674 = scmp.ge.s32.totalorder %s673, 1
            %s678 = sphi %s650, %s650
            %s679 = sphi %s651, %s651
          $region344: #{tpu_custom_call.1} parent=340 // loop_header_branch
            %676 = sbr.rel (%p674) target = $region348
          $region345: #{tpu_custom_call.1} parent=340 // loop_body
            %v680 = vld [vmem:[%s678] sm:%s671]
            %681 = vst [vmem:[%s679] sm:%s671] %v680
          $region346: #{tpu_custom_call.1} parent=340 // loop_footer
            %s677 = sadd.s32 1, %s673
          $region347: #{tpu_custom_call.1} parent=340 // loop_footer_branch
            %672 = sbr.rel target = $region343
          $region348: #{tpu_custom_call.1} parent=340 // loop_exit
            _
        $region341: #{tpu_custom_call.1} parent=325 // pred_fallthru
          _
      $region326: #{tpu_custom_call.1} parent=51 // pred_fallthru
        _
      // Predicated region
      $region327: #{tpu_custom_call.1} parent=51 // pred_check
        _
      $region328: #{tpu_custom_call.1} parent=51 // pred_check_branch
        %655 = sbr.rel (0) target = $region330
      $region329: #{tpu_custom_call.1} parent=51 // pred_region
        %s657 = ssub.s32 2, 1
        loop: start=0, step=1, limit=1
        $region331: #{tpu_custom_call.1} parent=329 // loop_pre_header
          _
        $region332: #{tpu_custom_call.1} parent=329 // loop_header
          %s659 = sphi 0, %s663
          %p660 = scmp.ge.s32.totalorder %s659, 1
          %s664 = sphi %s650, %s650
          %s665 = sphi %s651, %s651
        $region333: #{tpu_custom_call.1} parent=329 // loop_header_branch
          %662 = sbr.rel (%p660) target = $region337
        $region334: #{tpu_custom_call.1} parent=329 // loop_body
          %v666 = vld [vmem:[%s664] sm:%s657]
          %667 = vst [vmem:[%s665] sm:%s657] %v666
        $region335: #{tpu_custom_call.1} parent=329 // loop_footer
          %s663 = sadd.s32 1, %s659
        $region336: #{tpu_custom_call.1} parent=329 // loop_footer_branch
          %658 = sbr.rel target = $region332
        $region337: #{tpu_custom_call.1} parent=329 // loop_exit
          _
      $region330: #{tpu_custom_call.1} parent=51 // pred_fallthru
        _
      // Predicated region
      $region349: #{tpu_custom_call.1} parent=51 // pred_check
        _
      $region350: #{tpu_custom_call.1} parent=51 // pred_check_branch
        %684 = sbr.rel (0) target = $region352
      $region351: #{tpu_custom_call.1} parent=51 // pred_region
        %685 = vsyncadd %s363, 16
      $region352: #{tpu_custom_call.1} parent=51 // pred_fallthru
        _
      %s686 = scalar_lea.vmem %s2, %s319
      %s687 = scalar_lea.vmem [#allocation2], 5
      // Predicated region
      $region353: #{tpu_custom_call.1} parent=51 // pred_check
        _
      $region354: #{tpu_custom_call.1} parent=51 // pred_check_branch
        %689 = sbr.rel target = $region356
      $region355: #{tpu_custom_call.1} parent=51 // pred_region
        // Predicated region
        $region368: #{tpu_custom_call.1} parent=355 // pred_check
          _
        $region369: #{tpu_custom_call.1} parent=355 // pred_check_branch
          %705 = sbr.rel (0) target = $region371
        $region370: #{tpu_custom_call.1} parent=355 // pred_region
          %s707 = ssub.s32 2, 1
          loop: start=0, step=1, limit=1
          $region372: #{tpu_custom_call.1} parent=370 // loop_pre_header
            _
          $region373: #{tpu_custom_call.1} parent=370 // loop_header
            %s709 = sphi 0, %s713
            %p710 = scmp.ge.s32.totalorder %s709, 1
            %s714 = sphi %s686, %s686
            %s715 = sphi %s687, %s687
          $region374: #{tpu_custom_call.1} parent=370 // loop_header_branch
            %712 = sbr.rel (%p710) target = $region378
          $region375: #{tpu_custom_call.1} parent=370 // loop_body
            %v716 = vld [vmem:[%s714] sm:%s707]
            %717 = vst [vmem:[%s715] sm:%s707] %v716
          $region376: #{tpu_custom_call.1} parent=370 // loop_footer
            %s713 = sadd.s32 1, %s709
          $region377: #{tpu_custom_call.1} parent=370 // loop_footer_branch
            %708 = sbr.rel target = $region373
          $region378: #{tpu_custom_call.1} parent=370 // loop_exit
            _
        $region371: #{tpu_custom_call.1} parent=355 // pred_fallthru
          _
      $region356: #{tpu_custom_call.1} parent=51 // pred_fallthru
        _
      // Predicated region
      $region357: #{tpu_custom_call.1} parent=51 // pred_check
        _
      $region358: #{tpu_custom_call.1} parent=51 // pred_check_branch
        %691 = sbr.rel (0) target = $region360
      $region359: #{tpu_custom_call.1} parent=51 // pred_region
        %s693 = ssub.s32 2, 1
        loop: start=0, step=1, limit=1
        $region361: #{tpu_custom_call.1} parent=359 // loop_pre_header
          _
        $region362: #{tpu_custom_call.1} parent=359 // loop_header
          %s695 = sphi 0, %s699
          %p696 = scmp.ge.s32.totalorder %s695, 1
          %s700 = sphi %s686, %s686
          %s701 = sphi %s687, %s687
        $region363: #{tpu_custom_call.1} parent=359 // loop_header_branch
          %698 = sbr.rel (%p696) target = $region367
        $region364: #{tpu_custom_call.1} parent=359 // loop_body
          %v702 = vld [vmem:[%s700] sm:%s693]
          %703 = vst [vmem:[%s701] sm:%s693] %v702
        $region365: #{tpu_custom_call.1} parent=359 // loop_footer
          %s699 = sadd.s32 1, %s695
        $region366: #{tpu_custom_call.1} parent=359 // loop_footer_branch
          %694 = sbr.rel target = $region362
        $region367: #{tpu_custom_call.1} parent=359 // loop_exit
          _
      $region360: #{tpu_custom_call.1} parent=51 // pred_fallthru
        _
      // Predicated region
      $region379: #{tpu_custom_call.1} parent=51 // pred_check
        _
      $region380: #{tpu_custom_call.1} parent=51 // pred_check_branch
        %720 = sbr.rel (0) target = $region382
      $region381: #{tpu_custom_call.1} parent=51 // pred_region
        %721 = vsyncadd [#allocation4], 16
      $region382: #{tpu_custom_call.1} parent=51 // pred_fallthru
        _
      %s722 = scalar_lea.vmem %s3, %s320
      %s723 = scalar_lea.vmem [#allocation3], 5
      // Predicated region
      $region383: #{tpu_custom_call.1} parent=51 // pred_check
        _
      $region384: #{tpu_custom_call.1} parent=51 // pred_check_branch
        %725 = sbr.rel target = $region386
      $region385: #{tpu_custom_call.1} parent=51 // pred_region
        // Predicated region
        $region398: #{tpu_custom_call.1} parent=385 // pred_check
          _
        $region399: #{tpu_custom_call.1} parent=385 // pred_check_branch
          %741 = sbr.rel (0) target = $region401
        $region400: #{tpu_custom_call.1} parent=385 // pred_region
          %s743 = ssub.s32 2, 1
          loop: start=0, step=1, limit=1
          $region402: #{tpu_custom_call.1} parent=400 // loop_pre_header
            _
          $region403: #{tpu_custom_call.1} parent=400 // loop_header
            %s745 = sphi 0, %s749
            %p746 = scmp.ge.s32.totalorder %s745, 1
            %s750 = sphi %s722, %s722
            %s751 = sphi %s723, %s723
          $region404: #{tpu_custom_call.1} parent=400 // loop_header_branch
            %748 = sbr.rel (%p746) target = $region408
          $region405: #{tpu_custom_call.1} parent=400 // loop_body
            %v752 = vld [vmem:[%s750] sm:%s743]
            %753 = vst [vmem:[%s751] sm:%s743] %v752
          $region406: #{tpu_custom_call.1} parent=400 // loop_footer
            %s749 = sadd.s32 1, %s745
          $region407: #{tpu_custom_call.1} parent=400 // loop_footer_branch
            %744 = sbr.rel target = $region403
          $region408: #{tpu_custom_call.1} parent=400 // loop_exit
            _
        $region401: #{tpu_custom_call.1} parent=385 // pred_fallthru
          _
      $region386: #{tpu_custom_call.1} parent=51 // pred_fallthru
        _
      // Predicated region
      $region387: #{tpu_custom_call.1} parent=51 // pred_check
        _
      $region388: #{tpu_custom_call.1} parent=51 // pred_check_branch
        %727 = sbr.rel (0) target = $region390
      $region389: #{tpu_custom_call.1} parent=51 // pred_region
        %s729 = ssub.s32 2, 1
        loop: start=0, step=1, limit=1
        $region391: #{tpu_custom_call.1} parent=389 // loop_pre_header
          _
        $region392: #{tpu_custom_call.1} parent=389 // loop_header
          %s731 = sphi 0, %s735
          %p732 = scmp.ge.s32.totalorder %s731, 1
          %s736 = sphi %s722, %s722
          %s737 = sphi %s723, %s723
        $region393: #{tpu_custom_call.1} parent=389 // loop_header_branch
          %734 = sbr.rel (%p732) target = $region397
        $region394: #{tpu_custom_call.1} parent=389 // loop_body
          %v738 = vld [vmem:[%s736] sm:%s729]
          %739 = vst [vmem:[%s737] sm:%s729] %v738
        $region395: #{tpu_custom_call.1} parent=389 // loop_footer
          %s735 = sadd.s32 1, %s731
        $region396: #{tpu_custom_call.1} parent=389 // loop_footer_branch
          %730 = sbr.rel target = $region392
        $region397: #{tpu_custom_call.1} parent=389 // loop_exit
          _
      $region390: #{tpu_custom_call.1} parent=51 // pred_fallthru
        _
      // Predicated region
      $region409: #{tpu_custom_call.1} parent=51 // pred_check
        _
      $region410: #{tpu_custom_call.1} parent=51 // pred_check_branch
        %756 = sbr.rel (0) target = $region412
      $region411: #{tpu_custom_call.1} parent=51 // pred_region
        %757 = vsyncadd %s363, 16
      $region412: #{tpu_custom_call.1} parent=51 // pred_fallthru
        _
      %s758 = scalar_lea.vmem %s2, %s322
      %s759 = scalar_lea.vmem [#allocation2], 6
      // Predicated region
      $region413: #{tpu_custom_call.1} parent=51 // pred_check
        _
      $region414: #{tpu_custom_call.1} parent=51 // pred_check_branch
        %761 = sbr.rel target = $region416
      $region415: #{tpu_custom_call.1} parent=51 // pred_region
        // Predicated region
        $region428: #{tpu_custom_call.1} parent=415 // pred_check
          _
        $region429: #{tpu_custom_call.1} parent=415 // pred_check_branch
          %777 = sbr.rel (0) target = $region431
        $region430: #{tpu_custom_call.1} parent=415 // pred_region
          %s779 = ssub.s32 2, 1
          loop: start=0, step=1, limit=1
          $region432: #{tpu_custom_call.1} parent=430 // loop_pre_header
            _
          $region433: #{tpu_custom_call.1} parent=430 // loop_header
            %s781 = sphi 0, %s785
            %p782 = scmp.ge.s32.totalorder %s781, 1
            %s786 = sphi %s758, %s758
            %s787 = sphi %s759, %s759
          $region434: #{tpu_custom_call.1} parent=430 // loop_header_branch
            %784 = sbr.rel (%p782) target = $region438
          $region435: #{tpu_custom_call.1} parent=430 // loop_body
            %v788 = vld [vmem:[%s786] sm:%s779]
            %789 = vst [vmem:[%s787] sm:%s779] %v788
          $region436: #{tpu_custom_call.1} parent=430 // loop_footer
            %s785 = sadd.s32 1, %s781
          $region437: #{tpu_custom_call.1} parent=430 // loop_footer_branch
            %780 = sbr.rel target = $region433
          $region438: #{tpu_custom_call.1} parent=430 // loop_exit
            _
        $region431: #{tpu_custom_call.1} parent=415 // pred_fallthru
          _
      $region416: #{tpu_custom_call.1} parent=51 // pred_fallthru
        _
      // Predicated region
      $region417: #{tpu_custom_call.1} parent=51 // pred_check
        _
      $region418: #{tpu_custom_call.1} parent=51 // pred_check_branch
        %763 = sbr.rel (0) target = $region420
      $region419: #{tpu_custom_call.1} parent=51 // pred_region
        %s765 = ssub.s32 2, 1
        loop: start=0, step=1, limit=1
        $region421: #{tpu_custom_call.1} parent=419 // loop_pre_header
          _
        $region422: #{tpu_custom_call.1} parent=419 // loop_header
          %s767 = sphi 0, %s771
          %p768 = scmp.ge.s32.totalorder %s767, 1
          %s772 = sphi %s758, %s758
          %s773 = sphi %s759, %s759
        $region423: #{tpu_custom_call.1} parent=419 // loop_header_branch
          %770 = sbr.rel (%p768) target = $region427
        $region424: #{tpu_custom_call.1} parent=419 // loop_body
          %v774 = vld [vmem:[%s772] sm:%s765]
          %775 = vst [vmem:[%s773] sm:%s765] %v774
        $region425: #{tpu_custom_call.1} parent=419 // loop_footer
          %s771 = sadd.s32 1, %s767
        $region426: #{tpu_custom_call.1} parent=419 // loop_footer_branch
          %766 = sbr.rel target = $region422
        $region427: #{tpu_custom_call.1} parent=419 // loop_exit
          _
      $region420: #{tpu_custom_call.1} parent=51 // pred_fallthru
        _
      // Predicated region
      $region439: #{tpu_custom_call.1} parent=51 // pred_check
        _
      $region440: #{tpu_custom_call.1} parent=51 // pred_check_branch
        %792 = sbr.rel (0) target = $region442
      $region441: #{tpu_custom_call.1} parent=51 // pred_region
        %793 = vsyncadd [#allocation4], 16
      $region442: #{tpu_custom_call.1} parent=51 // pred_fallthru
        _
      %s794 = scalar_lea.vmem %s3, %s323
      %s795 = scalar_lea.vmem [#allocation3], 6
      // Predicated region
      $region443: #{tpu_custom_call.1} parent=51 // pred_check
        _
      $region444: #{tpu_custom_call.1} parent=51 // pred_check_branch
        %797 = sbr.rel target = $region446
      $region445: #{tpu_custom_call.1} parent=51 // pred_region
        // Predicated region
        $region458: #{tpu_custom_call.1} parent=445 // pred_check
          _
        $region459: #{tpu_custom_call.1} parent=445 // pred_check_branch
          %813 = sbr.rel (0) target = $region461
        $region460: #{tpu_custom_call.1} parent=445 // pred_region
          %s815 = ssub.s32 2, 1
          loop: start=0, step=1, limit=1
          $region462: #{tpu_custom_call.1} parent=460 // loop_pre_header
            _
          $region463: #{tpu_custom_call.1} parent=460 // loop_header
            %s817 = sphi 0, %s821
            %p818 = scmp.ge.s32.totalorder %s817, 1
            %s822 = sphi %s794, %s794
            %s823 = sphi %s795, %s795
          $region464: #{tpu_custom_call.1} parent=460 // loop_header_branch
            %820 = sbr.rel (%p818) target = $region468
          $region465: #{tpu_custom_call.1} parent=460 // loop_body
            %v824 = vld [vmem:[%s822] sm:%s815]
            %825 = vst [vmem:[%s823] sm:%s815] %v824
          $region466: #{tpu_custom_call.1} parent=460 // loop_footer
            %s821 = sadd.s32 1, %s817
          $region467: #{tpu_custom_call.1} parent=460 // loop_footer_branch
            %816 = sbr.rel target = $region463
          $region468: #{tpu_custom_call.1} parent=460 // loop_exit
            _
        $region461: #{tpu_custom_call.1} parent=445 // pred_fallthru
          _
      $region446: #{tpu_custom_call.1} parent=51 // pred_fallthru
        _
      // Predicated region
      $region447: #{tpu_custom_call.1} parent=51 // pred_check
        _
      $region448: #{tpu_custom_call.1} parent=51 // pred_check_branch
        %799 = sbr.rel (0) target = $region450
      $region449: #{tpu_custom_call.1} parent=51 // pred_region
        %s801 = ssub.s32 2, 1
        loop: start=0, step=1, limit=1
        $region451: #{tpu_custom_call.1} parent=449 // loop_pre_header
          _
        $region452: #{tpu_custom_call.1} parent=449 // loop_header
          %s803 = sphi 0, %s807
          %p804 = scmp.ge.s32.totalorder %s803, 1
          %s808 = sphi %s794, %s794
          %s809 = sphi %s795, %s795
        $region453: #{tpu_custom_call.1} parent=449 // loop_header_branch
          %806 = sbr.rel (%p804) target = $region457
        $region454: #{tpu_custom_call.1} parent=449 // loop_body
          %v810 = vld [vmem:[%s808] sm:%s801]
          %811 = vst [vmem:[%s809] sm:%s801] %v810
        $region455: #{tpu_custom_call.1} parent=449 // loop_footer
          %s807 = sadd.s32 1, %s803
        $region456: #{tpu_custom_call.1} parent=449 // loop_footer_branch
          %802 = sbr.rel target = $region452
        $region457: #{tpu_custom_call.1} parent=449 // loop_exit
          _
      $region450: #{tpu_custom_call.1} parent=51 // pred_fallthru
        _
      // Predicated region
      $region469: #{tpu_custom_call.1} parent=51 // pred_check
        _
      $region470: #{tpu_custom_call.1} parent=51 // pred_check_branch
        %828 = sbr.rel (0) target = $region472
      $region471: #{tpu_custom_call.1} parent=51 // pred_region
        %829 = vsyncadd %s363, 16
      $region472: #{tpu_custom_call.1} parent=51 // pred_fallthru
        _
      %s830 = scalar_lea.vmem %s2, %s325
      %s831 = scalar_lea.vmem [#allocation2], 7
      // Predicated region
      $region473: #{tpu_custom_call.1} parent=51 // pred_check
        _
      $region474: #{tpu_custom_call.1} parent=51 // pred_check_branch
        %833 = sbr.rel target = $region476
      $region475: #{tpu_custom_call.1} parent=51 // pred_region
        // Predicated region
        $region488: #{tpu_custom_call.1} parent=475 // pred_check
          _
        $region489: #{tpu_custom_call.1} parent=475 // pred_check_branch
          %849 = sbr.rel (0) target = $region491
        $region490: #{tpu_custom_call.1} parent=475 // pred_region
          %s851 = ssub.s32 2, 1
          loop: start=0, step=1, limit=1
          $region492: #{tpu_custom_call.1} parent=490 // loop_pre_header
            _
          $region493: #{tpu_custom_call.1} parent=490 // loop_header
            %s853 = sphi 0, %s857
            %p854 = scmp.ge.s32.totalorder %s853, 1
            %s858 = sphi %s830, %s830
            %s859 = sphi %s831, %s831
          $region494: #{tpu_custom_call.1} parent=490 // loop_header_branch
            %856 = sbr.rel (%p854) target = $region498
          $region495: #{tpu_custom_call.1} parent=490 // loop_body
            %v860 = vld [vmem:[%s858] sm:%s851]
            %861 = vst [vmem:[%s859] sm:%s851] %v860
          $region496: #{tpu_custom_call.1} parent=490 // loop_footer
            %s857 = sadd.s32 1, %s853
          $region497: #{tpu_custom_call.1} parent=490 // loop_footer_branch
            %852 = sbr.rel target = $region493
          $region498: #{tpu_custom_call.1} parent=490 // loop_exit
            _
        $region491: #{tpu_custom_call.1} parent=475 // pred_fallthru
          _
      $region476: #{tpu_custom_call.1} parent=51 // pred_fallthru
        _
      // Predicated region
      $region477: #{tpu_custom_call.1} parent=51 // pred_check
        _
      $region478: #{tpu_custom_call.1} parent=51 // pred_check_branch
        %835 = sbr.rel (0) target = $region480
      $region479: #{tpu_custom_call.1} parent=51 // pred_region
        %s837 = ssub.s32 2, 1
        loop: start=0, step=1, limit=1
        $region481: #{tpu_custom_call.1} parent=479 // loop_pre_header
          _
        $region482: #{tpu_custom_call.1} parent=479 // loop_header
          %s839 = sphi 0, %s843
          %p840 = scmp.ge.s32.totalorder %s839, 1
          %s844 = sphi %s830, %s830
          %s845 = sphi %s831, %s831
        $region483: #{tpu_custom_call.1} parent=479 // loop_header_branch
          %842 = sbr.rel (%p840) target = $region487
        $region484: #{tpu_custom_call.1} parent=479 // loop_body
          %v846 = vld [vmem:[%s844] sm:%s837]
          %847 = vst [vmem:[%s845] sm:%s837] %v846
        $region485: #{tpu_custom_call.1} parent=479 // loop_footer
          %s843 = sadd.s32 1, %s839
        $region486: #{tpu_custom_call.1} parent=479 // loop_footer_branch
          %838 = sbr.rel target = $region482
        $region487: #{tpu_custom_call.1} parent=479 // loop_exit
          _
      $region480: #{tpu_custom_call.1} parent=51 // pred_fallthru
        _
      // Predicated region
      $region499: #{tpu_custom_call.1} parent=51 // pred_check
        _
      $region500: #{tpu_custom_call.1} parent=51 // pred_check_branch
        %864 = sbr.rel (0) target = $region502
      $region501: #{tpu_custom_call.1} parent=51 // pred_region
        %865 = vsyncadd [#allocation4], 16
      $region502: #{tpu_custom_call.1} parent=51 // pred_fallthru
        _
      %s866 = scalar_lea.vmem %s3, %s326
      %s867 = scalar_lea.vmem [#allocation3], 7
      // Predicated region
      $region503: #{tpu_custom_call.1} parent=51 // pred_check
        _
      $region504: #{tpu_custom_call.1} parent=51 // pred_check_branch
        %869 = sbr.rel target = $region506
      $region505: #{tpu_custom_call.1} parent=51 // pred_region
        // Predicated region
        $region518: #{tpu_custom_call.1} parent=505 // pred_check
          _
        $region519: #{tpu_custom_call.1} parent=505 // pred_check_branch
          %885 = sbr.rel (0) target = $region521
        $region520: #{tpu_custom_call.1} parent=505 // pred_region
          %s887 = ssub.s32 2, 1
          loop: start=0, step=1, limit=1
          $region522: #{tpu_custom_call.1} parent=520 // loop_pre_header
            _
          $region523: #{tpu_custom_call.1} parent=520 // loop_header
            %s889 = sphi 0, %s893
            %p890 = scmp.ge.s32.totalorder %s889, 1
            %s894 = sphi %s866, %s866
            %s895 = sphi %s867, %s867
          $region524: #{tpu_custom_call.1} parent=520 // loop_header_branch
            %892 = sbr.rel (%p890) target = $region528
          $region525: #{tpu_custom_call.1} parent=520 // loop_body
            %v896 = vld [vmem:[%s894] sm:%s887]
            %897 = vst [vmem:[%s895] sm:%s887] %v896
          $region526: #{tpu_custom_call.1} parent=520 // loop_footer
            %s893 = sadd.s32 1, %s889
          $region527: #{tpu_custom_call.1} parent=520 // loop_footer_branch
            %888 = sbr.rel target = $region523
          $region528: #{tpu_custom_call.1} parent=520 // loop_exit
            _
        $region521: #{tpu_custom_call.1} parent=505 // pred_fallthru
          _
      $region506: #{tpu_custom_call.1} parent=51 // pred_fallthru
        _
      // Predicated region
      $region507: #{tpu_custom_call.1} parent=51 // pred_check
        _
      $region508: #{tpu_custom_call.1} parent=51 // pred_check_branch
        %871 = sbr.rel (0) target = $region510
      $region509: #{tpu_custom_call.1} parent=51 // pred_region
        %s873 = ssub.s32 2, 1
        loop: start=0, step=1, limit=1
        $region511: #{tpu_custom_call.1} parent=509 // loop_pre_header
          _
        $region512: #{tpu_custom_call.1} parent=509 // loop_header
          %s875 = sphi 0, %s879
          %p876 = scmp.ge.s32.totalorder %s875, 1
          %s880 = sphi %s866, %s866
          %s881 = sphi %s867, %s867
        $region513: #{tpu_custom_call.1} parent=509 // loop_header_branch
          %878 = sbr.rel (%p876) target = $region517
        $region514: #{tpu_custom_call.1} parent=509 // loop_body
          %v882 = vld [vmem:[%s880] sm:%s873]
          %883 = vst [vmem:[%s881] sm:%s873] %v882
        $region515: #{tpu_custom_call.1} parent=509 // loop_footer
          %s879 = sadd.s32 1, %s875
        $region516: #{tpu_custom_call.1} parent=509 // loop_footer_branch
          %874 = sbr.rel target = $region512
        $region517: #{tpu_custom_call.1} parent=509 // loop_exit
          _
      $region510: #{tpu_custom_call.1} parent=51 // pred_fallthru
        _
      // Predicated region
      $region529: #{tpu_custom_call.1} parent=51 // pred_check
        _
      $region530: #{tpu_custom_call.1} parent=51 // pred_check_branch
        %900 = sbr.rel (0) target = $region532
      $region531: #{tpu_custom_call.1} parent=51 // pred_region
        %901 = vsyncadd %s363, 16
      $region532: #{tpu_custom_call.1} parent=51 // pred_fallthru
        _
      %s902 = smul.u32 1, 1
      %s903 = sshll.u32 %s902, 4
      %904 = dma.done [#allocation4], %s903
      %s905 = sshll.u32 %s902, 4
      %906 = dma.done %s363, %s905
      %s907 = sshll.u32 %s902, 4
      %908 = dma.done [#allocation4], %s907
      %s909 = sshll.u32 %s902, 4
      %910 = dma.done %s363, %s909
      %s911 = sshll.u32 %s902, 4
      %912 = dma.done [#allocation4], %s911
      %s913 = sshll.u32 %s902, 4
      %914 = dma.done %s363, %s913
      %s915 = sshll.u32 %s902, 4
      %916 = dma.done [#allocation4], %s915
      %s917 = sshll.u32 %s902, 4
      %918 = dma.done %s363, %s917
      %s919 = sshll.u32 %s902, 4
      %920 = dma.done [#allocation4], %s919
      %s921 = sshll.u32 %s902, 4
      %922 = dma.done %s363, %s921
      %s923 = sshll.u32 %s902, 4
      %924 = dma.done [#allocation4], %s923
      %s925 = sshll.u32 %s902, 4
      %926 = dma.done %s363, %s925
      %s927 = sshll.u32 %s902, 4
      %928 = dma.done [#allocation4], %s927
      %s929 = sshll.u32 %s902, 4
      %930 = dma.done %s363, %s929
      %s931 = sshll.u32 %s902, 4
      %932 = dma.done [#allocation4], %s931
      %s933 = sshll.u32 %s902, 4
      %934 = dma.done %s363, %s933
      %v935 = vld [vmem:[#allocation2] sm:$0xff]
      %v936 = vld [vmem:[#allocation3] sm:$0xff]
      %v937 = vmul.f32 %v935, %v936
      %v938 = vld [vmem:[%s4] sm:$0xff]
      %v939 = vld [vmem:[%s4 + $0x8] sm:$0xff]
      %v940 = vld [vmem:[%s5] sm:$0xff]
      %v941 = vld [vmem:[%s5 + $0x8] sm:$0xff]
      %943 = vrot.lane.b32.xlu0 %v936, 112
      %v944 = vpop.permute.xlu0 %943
      %vm945 = vcmask 130048
      %v946 = vsel %vm945, %v944, 0
      %948 = vmatpush.msra.mxu0 0.0
      %949 = vmatpush.msra.mxu0 0.0
      %950 = vmatpush.msra.mxu0 0.0
      %951 = vmatpush.msra.mxu0 0.0
      %952 = vmatpush.msra.mxu0 0.0
      %953 = vmatpush.msra.mxu0 0.0
      %954 = vmatpush.msra.mxu0 0.0
      %955 = vmatpush.msra.mxu0 0.0
      %956 = vmatpush.msra.mxu0 0.0
      %957 = vmatpush.msra.mxu0 0.0
      %958 = vmatpush.msra.mxu0 0.0
      %959 = vmatpush.msra.mxu0 0.0
      %960 = vmatpush.msra.mxu0 0.0
      %961 = vmatpush.msra.mxu0 0.0
      %962 = vmatpush.msra.mxu0 %v941
      %963 = vmatpush.msra.mxu0 %v940
      %964 = vmatmul.f32.gmra.mxu0 %v946
      %v965 = vpop.f32.mrf.mxu0
      %v966 = vadd.f32 0.0, %v965
      %967 = vdwg.mxu0
      %969 = vrot.lane.b32.xlu0 %v935, 112
      %v970 = vpop.permute.xlu0 %969
      %v971 = vsel %vm945, %v970, 0
      %973 = vmatpush.msra.mxu0 0.0
      %974 = vmatpush.msra.mxu0 0.0
      %975 = vmatpush.msra.mxu0 0.0
      %976 = vmatpush.msra.mxu0 0.0
      %977 = vmatpush.msra.mxu0 0.0
      %978 = vmatpush.msra.mxu0 0.0
      %979 = vmatpush.msra.mxu0 0.0
      %980 = vmatpush.msra.mxu0 0.0
      %981 = vmatpush.msra.mxu0 0.0
      %982 = vmatpush.msra.mxu0 0.0
      %983 = vmatpush.msra.mxu0 0.0
      %984 = vmatpush.msra.mxu0 0.0
      %985 = vmatpush.msra.mxu0 0.0
      %986 = vmatpush.msra.mxu0 0.0
      %987 = vmatpush.msra.mxu0 %v939
      %988 = vmatpush.msra.mxu0 %v938
      %989 = vmatmul.f32.gmra.mxu0 %v971
      %v990 = vpop.f32.mrf.mxu0
      %v991 = vadd.f32 %v966, %v990
      %992 = vdwg.mxu0
      %v993 = vld [vmem:[%s6] sm:$0x1]
      %v995 = vperm.slane %v993, 0
      %v997 = vadd.f32 %v991, %v995
      %v998 = vmax.f32 %v997, 0.0
      %v999 = vld [vmem:[%s7] sm:$0xff]
      %v1000 = vld [vmem:[%s7 + $0x8] sm:$0xff]
      %v1001 = vld [vmem:[%s7 + $0x10] sm:$0xff]
      %v1002 = vld [vmem:[%s7 + $0x18] sm:$0xff]
      %v1003 = vld [vmem:[%s7 + $0x20] sm:$0xff]
      %v1004 = vld [vmem:[%s7 + $0x28] sm:$0xff]
      %v1005 = vld [vmem:[%s7 + $0x30] sm:$0xff]
      %v1006 = vld [vmem:[%s7 + $0x38] sm:$0xff]
      %v1007 = vld [vmem:[%s7 + $0x40] sm:$0xff]
      %v1008 = vld [vmem:[%s7 + $0x48] sm:$0xff]
      %v1009 = vld [vmem:[%s7 + $0x50] sm:$0xff]
      %v1010 = vld [vmem:[%s7 + $0x58] sm:$0xff]
      %v1011 = vld [vmem:[%s7 + $0x60] sm:$0xff]
      %v1012 = vld [vmem:[%s7 + $0x68] sm:$0xff]
      %v1013 = vld [vmem:[%s7 + $0x70] sm:$0xff]
      %v1014 = vld [vmem:[%s7 + $0x78] sm:$0xff]
      %v1015 = vld [vmem:[%s8] sm:$0x1]
      %v1017 = vperm.slane %v1015, 0
      %1019 = vmatpush.msra.mxu0 %v1014
      %1020 = vmatpush.msra.mxu0 %v1013
      %1021 = vmatpush.msra.mxu0 %v1012
      %1022 = vmatpush.msra.mxu0 %v1011
      %1023 = vmatpush.msra.mxu0 %v1010
      %1024 = vmatpush.msra.mxu0 %v1009
      %1025 = vmatpush.msra.mxu0 %v1008
      %1026 = vmatpush.msra.mxu0 %v1007
      %1027 = vmatpush.msra.mxu0 %v1006
      %1028 = vmatpush.msra.mxu0 %v1005
      %1029 = vmatpush.msra.mxu0 %v1004
      %1030 = vmatpush.msra.mxu0 %v1003
      %1031 = vmatpush.msra.mxu0 %v1002
      %1032 = vmatpush.msra.mxu0 %v1001
      %1033 = vmatpush.msra.mxu0 %v1000
      %1034 = vmatpush.msra.mxu0 %v999
      %1035 = vmatmul.f32.gmra.mxu0 %v998
      %v1036 = vpop.f32.mrf.mxu0
      %v1037 = vadd.f32 %v1017, %v1036
      %1038 = vdwg.mxu0
      %v1039 = vmax.f32 %v1037, 0.0
      %v1040 = vld [vmem:[%s9] sm:$0x1]
      %v1042 = vperm.slane %v1040, 0
      %v1044 = vmul.f32 %v937, %v1042
      %v1045 = vld [vmem:[%s10] sm:$0x1]
      %v1047 = vperm.slane %v1045, 0
      %v1049 = vmul.f32 %v1039, %v1047
      %v1050 = vadd.f32 %v1044, %v1049
      %v1051 = vsel %vm945, %v1050, 0.0
      %1052 = vadd.xlane.f32.xlu0 %v1051
      %v1053 = vpop.xlane.xlu0 %1052
      %v1054 = vld [vmem:[#allocation8] sm:$0x1]
      %v1056 = vperm.slane %v1054, 0
      %v1058 = vadd.f32 %v1053, %v1056
      %v1059 = vxor.u32 %v1058, 2147483648
      %v1060 = vmul.f32 %v1059, 1.442695
      %v1061 = vpow.pop %v1060
      %v1062 = vadd.f32 %v1061, 1.0
      %v1063 = vrcp.pop %v1062
      %v1064 = vmul.f32 %v1062, %v1063
      %v1065 = vsub.f32 1.0, %v1064
      %v1066 = vmul.f32 %v1063, %v1065
      %v1067 = vadd.f32 %v1063, %v1066
      %vm1068 = vweird.f32 %v1062
      %vm1069 = vweird.f32 %v1063
      %vm1070 = vmor %vm1068, %vm1069
      %v1071 = vsel %vm1070, %v1063, %v1067
      %v1072 = vand.u32 2147483647, %v1062
      %vm1073 = vcmp.eq.f32.partialorder %v1072, 8.507059e+37
      %v1074 = vand.u32 %v1062, 2147483648
      %v1075 = vor.u32 1.1754944e-38, %v1074
      %v1076 = vsel %vm1073, %v1075, %v1071
      %v1077 = vmul.f32 1.0, %v1076
      %vm1078 = vcmask 7168
      %1079 = vst.msk [vmem:[%s302] sm:$0xff] %vm1078, %v1077
      %p1080 = scmp.lt.s32.totalorder %s38, 1
      %s1081 = scalar_select %p1080, %s38, 1
      %s1082 = smul.addr %s1081, 8
      %s1083 = scalar_lea.vmem %s12, %s1082
      // Predicated region
      $region533: #{tpu_custom_call.1} parent=51 // pred_check
        %p1084 = pneg %p224
      $region534: #{tpu_custom_call.1} parent=51 // pred_check_branch
        %1086 = sbr.rel (%p1084) target = $region536
      $region535: #{tpu_custom_call.1} parent=51 // pred_region
        _
      $region536: #{tpu_custom_call.1} parent=51 // pred_fallthru
        _
    $region52: #{tpu_custom_call.1} parent=5 // pred_fallthru
      _
    %p1087 = scmp.le.s32.totalorder 2, %s33
    // Predicated region
    $region537: #{tpu_custom_call.1} parent=5 // pred_check
      %p1088 = pneg %p1087
    $region538: #{tpu_custom_call.1} parent=5 // pred_check_branch
      %1090 = sbr.rel (%p1088) target = $region540
    $region539: #{tpu_custom_call.1} parent=5 // pred_region
      %s1091 = ssub.s32 %s33, 2
      // Predicated region
      $region541: #{tpu_custom_call.1} parent=539 // pred_check
        %p1092 = pneg %p230
      $region542: #{tpu_custom_call.1} parent=539 // pred_check_branch
        %1094 = sbr.rel (%p1092) target = $region544
      $region543: #{tpu_custom_call.1} parent=539 // pred_region
        %p1095 = scmp.lt.s32.totalorder %s39, 1
        %s1096 = scalar_select %p1095, %s39, 1
        %s1097 = smul.addr %s1096, 8
        %s1098 = scalar_lea.vmem %s12, %s1097
      $region544: #{tpu_custom_call.1} parent=539 // pred_fallthru
        _
    $region540: #{tpu_custom_call.1} parent=5 // pred_fallthru
      _
  $region6: #{tpu_custom_call.1} parent=0 // loop_footer
    %s37 = sadd.s32 1, %s33
  $region7: #{tpu_custom_call.1} parent=0 // loop_footer_branch
    %32 = sbr.rel target = $region3
  $region8: #{tpu_custom_call.1} parent=0 // loop_exit
    _
  %1099 = vsyncmov [#allocation4]
  %s1100 = vpop.sfrf %1099
  %p1101 = scmp.eq.s32.totalorder %s1100, 0
  %p1102 = pneg %p1101
  %1104 = shalt.err (%p1102)
  %s1105 = scalar_lea.sflag [#allocation4], 1
  %1106 = vsyncmov %s1105
  %s1107 = vpop.sfrf %1106
  %p1108 = scmp.eq.s32.totalorder %s1107, 0
  %p1109 = pneg %p1108
  %1111 = shalt.err (%p1109)

</llo_original>
